<compile_context>
chip_gen: v6e
topology: v6e:2x2x1
jax: 0.10.0
libtpu: 0.0.40
codegen_flags: <defaults>
</compile_context>

<pallas_src>
import jax
import jax.numpy as jnp
from jax.experimental import pallas as pl
from jax.experimental.pallas import tpu as pltpu

LANE = 128


def _round_up(n, m):
    return ((n + m - 1) // m) * m


def _choose_tile_b(B, max_tile=512):
    """Batch tile: as large as sensible for pipeline efficiency, multiple of 8 (sublane),
    but small enough that the grid has >=2 steps so v7x's two TensorCores both get work."""
    half = _round_up(max((B + 1) // 2, 1), 8)
    tile = min(max_tile, max(8, half))
    if tile >= 128:
        tile = (tile // 128) * 128   # lane/sublane-friendly multiple of 128 when big enough
    return tile


def generator_kernel(x_ref, w1_ref, b1_ref, w2_ref, b2_ref, o_ref):
    # Linear 1 on the MXU: cast x to bf16 in-kernel (rides idle VALU slots), f32 accumulation.
    h = jnp.dot(x_ref[...].astype(jnp.bfloat16), w1_ref[...],
                preferred_element_type=jnp.float32)
    # Bias + LeakyReLU(0.1) in f32 on the VPU.
    h = h + b1_ref[...]
    h = jnp.where(h > 0, h, 0.1 * h)
    # Linear 2 on the MXU: bf16 activations, f32 accumulation.
    y = jnp.dot(h.astype(jnp.bfloat16), w2_ref[...],
                preferred_element_type=jnp.float32)
    y = y + b2_ref[...]
    # Sigmoid via tanh: single EUP push, exact (no approx reciprocal). Cast at the store.
    o_ref[...] = (0.5 * jnp.tanh(0.5 * y) + 0.5).astype(o_ref.dtype)


def prepare_params(w1, b1, w2, b2):
    """One-time parameter prep: lane-dense padding + bf16 cast of the weights.

    w1: [z_dim, H]  (transpose of PyTorch's [out, in]),  b1: [H]
    w2: [H, img_dim],                                     b2: [img_dim]
    Zero pads are mathematically inert: padded hidden cols see bias 0 -> LeakyReLU(0)=0
    -> no contribution; padded output cols are ignored by consumers / the unpad wrapper.
    """
    z_dim, H = w1.shape
    img_dim = w2.shape[1]
    h_pad = _round_up(H, LANE)
    img_pad = _round_up(img_dim, LANE)
    w1_p = jnp.zeros((z_dim, h_pad), jnp.bfloat16).at[:, :H].set(w1.astype(jnp.bfloat16))
    b1_p = jnp.zeros((1, h_pad), jnp.float32).at[0, :H].set(b1.astype(jnp.float32))
    w2_p = jnp.zeros((h_pad, img_pad), jnp.bfloat16).at[:H, :img_dim].set(w2.astype(jnp.bfloat16))
    b2_p = jnp.zeros((1, img_pad), jnp.float32).at[0, :img_dim].set(b2.astype(jnp.float32))
    return {"w1": w1_p, "b1": b1_p, "w2": w2_p, "b2": b2_p,
            "z_dim": z_dim, "H": H, "img_dim": img_dim}


def generator_forward_padded(x, params, *, out_dtype=jnp.bfloat16, max_tile_b=512):
    """Performance path: returns the lane-dense padded output slab [b_pad, img_pad].

    No post-kernel slice copy. Padded rows (>= B) and padded output columns (>= img_dim)
    contain garbage (sigmoid of bias / 0.5) — consumers must not reduce over them.
    """
    B, z_dim = x.shape
    assert z_dim == params["z_dim"], "x feature dim must match z_dim"
    h_pad = params["w1"].shape[1]
    img_pad = params["w2"].shape[1]

    tile_b = _choose_tile_b(B, max_tile_b)
    b_pad = _round_up(B, tile_b)
    x_in = x if b_pad == B else jnp.zeros((b_pad, z_dim), x.dtype).at[:B].set(x)

    grid = (b_pad // tile_b,)

    out = pl.pallas_call(
        generator_kernel,
        out_shape=jax.ShapeDtypeStruct((b_pad, img_pad), out_dtype),
        grid=grid,
        in_specs=[
            # x tile: raw f32, full-extent (unpadded) last dim — one tile per grid step.
            pl.BlockSpec((tile_b, z_dim), lambda i: (i, 0)),
            pl.BlockSpec((z_dim, h_pad), lambda i: (0, 0)),    # w1: VMEM-resident
            pl.BlockSpec((1, h_pad), lambda i: (0, 0)),        # b1: VMEM-resident
            pl.BlockSpec((h_pad, img_pad), lambda i: (0, 0)),  # w2: VMEM-resident
            pl.BlockSpec((1, img_pad), lambda i: (0, 0)),      # b2: VMEM-resident
        ],
        out_specs=pl.BlockSpec((tile_b, img_pad), lambda i: (i, 0)),
        compiler_params=pltpu.CompilerParams(
            # Batch tiles are independent -> shard across TensorCores on v7x.
            dimension_semantics=("parallel",),
        ),
    )(x_in, params["w1"], params["b1"], params["w2"], params["b2"])

    return out


def generator_forward(x, params, *, out_dtype=jnp.bfloat16, max_tile_b=512):
    """Semantics wrapper: [B, img_dim] output (pays one slice copy; prefer the padded path
    in pipelines that can consume the 896-wide slab directly)."""
    B = x.shape[0]
    out = generator_forward_padded(x, params, out_dtype=out_dtype, max_tile_b=max_tile_b)
    return out[:B, :params["img_dim"]]


def init_params(key, z_dim, num_hidden, img_dim):
    """Deterministic init mimicking PyTorch nn.Linear default (uniform +/- 1/sqrt(fan_in))."""
    k1, k2, k3, k4 = jax.random.split(key, 4)
    bound1 = 1.0 / (z_dim ** 0.5)
    bound2 = 1.0 / (num_hidden ** 0.5)
    w1 = jax.random.uniform(k1, (z_dim, num_hidden), jnp.float32, -bound1, bound1)
    b1 = jax.random.uniform(k2, (num_hidden,), jnp.float32, -bound1, bound1)
    w2 = jax.random.uniform(k3, (num_hidden, img_dim), jnp.float32, -bound2, bound2)
    b2 = jax.random.uniform(k4, (img_dim,), jnp.float32, -bound2, bound2)
    return w1, b1, w2, b2


def reference_forward(x, w1, b1, w2, b2):
    h = x @ w1 + b1[None, :]
    h = jnp.where(h > 0, h, 0.1 * h)
    y = h @ w2 + b2[None, :]
    return jax.nn.sigmoid(y)


if __name__ == "__main__":
    # Module-consistent shapes: z_dim=64, num_hidden=128, img_dim=784 (28x28 MNIST-like).
    # B=256 -> tile_b=128, two grid steps: exercises the parallel batch axis.
    B, Z_DIM, NUM_HIDDEN, IMG_DIM = 256, 64, 128, 784

    key = jax.random.PRNGKey(0)
    kx, kp = jax.random.split(key)
    x = jax.random.normal(kx, (B, Z_DIM), dtype=jnp.float32)
    w1, b1, w2, b2 = init_params(kp, Z_DIM, NUM_HIDDEN, IMG_DIM)

    # One-time parameter prep (padding + bf16 cast hoisted out of the forward).
    params = prepare_params(w1, b1, w2, b2)

    out = generator_forward(x, params)
    out = jax.block_until_ready(out)

    ref = reference_forward(x, w1, b1, w2, b2)
    assert out.shape == (B, IMG_DIM)
    # bf16 MXU inputs + bf16 output store -> loosened tolerance vs pure-f32 reference.
    err = jnp.max(jnp.abs(out.astype(jnp.float32) - ref))
    assert jnp.allclose(out.astype(jnp.float32), ref, atol=2e-2, rtol=2e-2), float(err)

    print("KERNEL_OK")
</pallas_src>

<mosaic_0001>
module attributes {stable_mosaic.version = 11 : i64} {
  func.func @generator_kernel(%arg0: i32, %arg1: memref<128x64xf32, #tpu.memory_space<vmem>>, %arg2: memref<64x128xbf16, #tpu.memory_space<vmem>>, %arg3: memref<1x128xf32, #tpu.memory_space<vmem>>, %arg4: memref<128x896xbf16, #tpu.memory_space<vmem>>, %arg5: memref<1x896xf32, #tpu.memory_space<vmem>>, %arg6: memref<128x896xbf16, #tpu.memory_space<vmem>>) attributes {dimension_semantics = [#tpu.dimension_semantics<parallel>], iteration_bounds = array<i64: 2>, scalar_prefetch = 0 : i64, scratch_operands = 0 : i64, tpu.core_type = #tpu.core_type<tc>, window_params = [{transform_indices = @transform_0, window_bounds = array<i64: 128, 64>}, {pipeline_mode = #tpu.pipeline_mode<synchronous>, transform_indices = @transform_1, window_bounds = array<i64: 64, 128>}, {pipeline_mode = #tpu.pipeline_mode<synchronous>, transform_indices = @transform_2, window_bounds = array<i64: 1, 128>}, {pipeline_mode = #tpu.pipeline_mode<synchronous>, transform_indices = @transform_3, window_bounds = array<i64: 128, 896>}, {pipeline_mode = #tpu.pipeline_mode<synchronous>, transform_indices = @transform_4, window_bounds = array<i64: 1, 896>}, {transform_indices = @transform_5, window_bounds = array<i64: 128, 896>}]} {
    %c0 = arith.constant 0 : index
    %c0_0 = arith.constant 0 : index
    %0 = vector.load %arg1[%c0, %c0_0] : memref<128x64xf32, #tpu.memory_space<vmem>>, vector<128x64xf32>
    %1 = arith.truncf %0 : vector<128x64xf32> to vector<128x64xbf16>
    %c0_1 = arith.constant 0 : index
    %c0_2 = arith.constant 0 : index
    %2 = vector.load %arg2[%c0_1, %c0_2] : memref<64x128xbf16, #tpu.memory_space<vmem>>, vector<64x128xbf16>
    %cst = arith.constant dense<0.000000e+00> : vector<128x128xf32>
    %3 = tpu.matmul %1, %2, %cst {dimension_numbers = #tpu.dot_dimension_numbers<[1], [0], [0], [1], [0, 0, 1, 1], [], []>} : vector<128x64xbf16>, vector<64x128xbf16>, vector<128x128xf32> -> vector<128x128xf32>
    %c0_3 = arith.constant 0 : index
    %c0_4 = arith.constant 0 : index
    %4 = vector.load %arg3[%c0_3, %c0_4] : memref<1x128xf32, #tpu.memory_space<vmem>>, vector<1x128xf32>
    %5 = vector.broadcast %4 : vector<1x128xf32> to vector<128x128xf32>
    %6 = arith.addf %3, %5 : vector<128x128xf32>
    %cst_5 = arith.constant 0.000000e+00 : f32
    %7 = vector.broadcast %cst_5 : f32 to vector<128x128xf32>
    %8 = arith.cmpf ogt, %6, %7 : vector<128x128xf32>
    %cst_6 = arith.constant 1.000000e-01 : f32
    %9 = vector.broadcast %cst_6 : f32 to vector<128x128xf32>
    %10 = arith.mulf %9, %6 : vector<128x128xf32>
    %11 = arith.select %8, %6, %10 : vector<128x128xi1>, vector<128x128xf32>
    %12 = arith.truncf %11 : vector<128x128xf32> to vector<128x128xbf16>
    %c0_7 = arith.constant 0 : index
    %c0_8 = arith.constant 0 : index
    %13 = vector.load %arg4[%c0_7, %c0_8] : memref<128x896xbf16, #tpu.memory_space<vmem>>, vector<128x896xbf16>
    %cst_9 = arith.constant dense<0.000000e+00> : vector<128x896xf32>
    %14 = tpu.matmul %12, %13, %cst_9 {dimension_numbers = #tpu.dot_dimension_numbers<[1], [0], [0], [1], [0, 0, 1, 1], [], []>} : vector<128x128xbf16>, vector<128x896xbf16>, vector<128x896xf32> -> vector<128x896xf32>
    %c0_10 = arith.constant 0 : index
    %c0_11 = arith.constant 0 : index
    %15 = vector.load %arg5[%c0_10, %c0_11] : memref<1x896xf32, #tpu.memory_space<vmem>>, vector<1x896xf32>
    %16 = vector.broadcast %15 : vector<1x896xf32> to vector<128x896xf32>
    %17 = arith.addf %14, %16 : vector<128x896xf32>
    %cst_12 = arith.constant 5.000000e-01 : f32
    %18 = vector.broadcast %cst_12 : f32 to vector<128x896xf32>
    %19 = arith.mulf %18, %17 : vector<128x896xf32>
    %20 = math.tanh %19 : vector<128x896xf32>
    %cst_13 = arith.constant 5.000000e-01 : f32
    %21 = vector.broadcast %cst_13 : f32 to vector<128x896xf32>
    %22 = arith.mulf %21, %20 : vector<128x896xf32>
    %cst_14 = arith.constant 5.000000e-01 : f32
    %23 = vector.broadcast %cst_14 : f32 to vector<128x896xf32>
    %24 = arith.addf %22, %23 : vector<128x896xf32>
    %25 = arith.truncf %24 : vector<128x896xf32> to vector<128x896xbf16>
    %c0_15 = arith.constant 0 : index
    %c0_16 = arith.constant 0 : index
    %26 = vector.load %arg6[%c0_15, %c0_16] : memref<128x896xbf16, #tpu.memory_space<vmem>>, vector<128x896xbf16>
    tpu.vector_store %arg6[%c0_15, %c0_16], %25 {strides = array<i32>} : memref<128x896xbf16, #tpu.memory_space<vmem>>, vector<128x896xbf16>,
    return
  }
  func.func @transform_0(%arg0: i32) -> (i32, i32) {
    %c0_i32 = arith.constant 0 : i32
    %c0_i32_0 = arith.constant 0 : i32
    return %arg0, %c0_i32 : i32, i32
  }
  func.func @transform_1(%arg0: i32) -> (i32, i32) {
    %c0_i32 = arith.constant 0 : i32
    %c0_i32_0 = arith.constant 0 : i32
    %c0_i32_1 = arith.constant 0 : i32
    return %c0_i32, %c0_i32_0 : i32, i32
  }
  func.func @transform_2(%arg0: i32) -> (i32, i32) {
    %c0_i32 = arith.constant 0 : i32
    %c0_i32_0 = arith.constant 0 : i32
    %c0_i32_1 = arith.constant 0 : i32
    return %c0_i32, %c0_i32_0 : i32, i32
  }
  func.func @transform_3(%arg0: i32) -> (i32, i32) {
    %c0_i32 = arith.constant 0 : i32
    %c0_i32_0 = arith.constant 0 : i32
    %c0_i32_1 = arith.constant 0 : i32
    return %c0_i32, %c0_i32_0 : i32, i32
  }
  func.func @transform_4(%arg0: i32) -> (i32, i32) {
    %c0_i32 = arith.constant 0 : i32
    %c0_i32_0 = arith.constant 0 : i32
    %c0_i32_1 = arith.constant 0 : i32
    return %c0_i32, %c0_i32_0 : i32, i32
  }
  func.func @transform_5(%arg0: i32) -> (i32, i32) {
    %c0_i32 = arith.constant 0 : i32
    %c0_i32_0 = arith.constant 0 : i32
    return %arg0, %c0_i32 : i32, i32
  }
}

</mosaic_0001>

<llo_original>
// kernel: tpu_custom_call.1
$region0: #{tpu_custom_call.1}
  #allocation0 [shape = 'u32[]', space=smem, size = 0x4, offset = 0x4, fixed_abs, tag = 'smem constant byte address 0x4 - core index']
  #allocation1 [shape = 'u32[144,128]{1,0:T(1,128)}', space=vmem, size = 0x12000, scoped, tag = 'internal scratch']
  %s0 = inlined_call_operand.vmem [shape: f32[256,64], index: 0, kind: input, shape index: {}]
  %s1 = inlined_call_operand.vmem [shape: bf16[64,128], index: 1, kind: input, shape index: {}]
  %s2 = inlined_call_operand.vmem [shape: f32[1,128], index: 2, kind: input, shape index: {}]
  %s3 = inlined_call_operand.hbm [shape: bf16[128,896], index: 3, kind: input, shape index: {}]
  %s4 = inlined_call_operand.vmem [shape: f32[1,896], index: 4, kind: input, shape index: {}]
  %s5 = inlined_call_operand.hbm [shape: bf16[256,896], index: 5, kind: output, shape index: {}]
  %s6 = sld [smem:[#allocation0]]
  $region57: #{tpu_custom_call.1} parent=0
    _
  %s8 = ssub.s32 1, %s6
  %s9 = scalar_select 0, %s8, %s6
  $region1: #{tpu_custom_call.1} parent=0
    #allocation2 [shape = 'u8[229376]{0}', space=vmem, size = 0x38000, scoped, tag = 'input window, operand 3, single buffered']
    #allocation3 [shape = 's32[2]{0}', space=sflag, size = 0x8, scoped, tag = 'scoped memory for tpu_custom_call.1']
    #allocation4 [shape = 's32[2]{0}', space=sflag, size = 0x8, scoped, tag = 'scoped memory for tpu_custom_call.1']
    #allocation5 [shape = 'u8[458752]{0}', space=vmem, size = 0x70000, scoped, tag = 'output window, operand 0']
    %10 = vsyncpa [#allocation3], 0
    %11 = vsyncpa [#allocation4], 0
    %s12 = scalar_lea.sflag [#allocation4], 1
    %13 = vsyncpa %s12, 0
    loop: start=0, step=1, limit=4
    $region2: #{tpu_custom_call.1} parent=1 // loop_pre_header
      _
    $region3: #{tpu_custom_call.1} parent=1 // loop_header
      %s15 = sphi 0, %s19
      %p16 = scmp.ge.s32.totalorder %s15, 4
      %s25 = sphi 0, %s27
      %s28 = sphi 0, %s25
      %s29 = sphi 0, %s28
      %s45 = sphi 0, %s29
      %s49 = sphi 0, %s49
      %s51 = sphi 0, %s49
      %s52 = sphi 0, %s51
      %s66 = sphi 0, %s52
      %s70 = sphi 0, %s70
      %s72 = sphi 0, %s70
      %s73 = sphi 0, %s72
      %s87 = sphi 0, %s73
      %s91 = sphi 0, %s91
      %s93 = sphi 0, %s91
      %s94 = sphi 0, %s93
      %s108 = sphi 0, %s94
      %s112 = sphi 0, %s112
      %s114 = sphi 0, %s112
      %s115 = sphi 0, %s114
      %s129 = sphi 0, %s115
      %s135 = sphi 0, %s137
      %s138 = sphi 0, %s135
      %s139 = sphi 0, %s138
      %s155 = sphi 0, %s139
    $region4: #{tpu_custom_call.1} parent=1 // loop_header_branch
      %18 = sbr.rel (%p16) target = $region8
    $region5: #{tpu_custom_call.1} parent=1 // loop_body
      %s20 = ssub.s32 %s15, 1
      %s21 = ssub.s32 %s15, 2
      %s22 = sadd.s32 %s15, 1
      %s23 = ssub.s32 %s15, %s22
      %p24 = scmp.eq.s32.totalorder %s23, 0
      %s26 = sadd.s32 %s25, 1
      %s27 = scalar_select %p24, %s25, %s26
      %p30 = pneg %p24
      %p31 = scmp.eq.s32.totalorder %s15, 1
      %p32 = por %p30, %p31
      %p33 = scmp.ne.s32.totalorder %s25, %s28
      %p34 = scmp.eq.s32.totalorder %s15, 0
      %p35 = por %p33, %p34
      %p36 = scmp.ne.s32.totalorder %s25, %s28
      %p37 = scmp.eq.s32.totalorder %s20, 1
      %p38 = por %p36, %p37
      %p39 = scmp.ne.s32.totalorder %s28, %s29
      %p40 = scmp.eq.s32.totalorder %s20, 0
      %p41 = por %p39, %p40
      %p42 = scmp.ne.s32.totalorder %s28, %s29
      %p43 = scmp.eq.s32.totalorder %s21, 1
      %p44 = por %p42, %p43
      %p46 = scmp.ne.s32.totalorder %s29, %s45
      %p47 = scmp.eq.s32.totalorder %s21, 0
      %p48 = por %p46, %p47
      %s50 = sadd.s32 %s49, 1
      %p53 = scmp.eq.s32.totalorder %s15, 1
      %p54 = scmp.ne.s32.totalorder %s49, %s51
      %p55 = scmp.eq.s32.totalorder %s15, 0
      %p56 = por %p54, %p55
      %p57 = scmp.ne.s32.totalorder %s49, %s51
      %p58 = scmp.eq.s32.totalorder %s20, 1
      %p59 = por %p57, %p58
      %p60 = scmp.ne.s32.totalorder %s51, %s52
      %p61 = scmp.eq.s32.totalorder %s20, 0
      %p62 = por %p60, %p61
      %p63 = scmp.ne.s32.totalorder %s51, %s52
      %p64 = scmp.eq.s32.totalorder %s21, 1
      %p65 = por %p63, %p64
      %p67 = scmp.ne.s32.totalorder %s52, %s66
      %p68 = scmp.eq.s32.totalorder %s21, 0
      %p69 = por %p67, %p68
      %s71 = sadd.s32 %s70, 1
      %p74 = scmp.eq.s32.totalorder %s15, 1
      %p75 = scmp.ne.s32.totalorder %s70, %s72
      %p76 = scmp.eq.s32.totalorder %s15, 0
      %p77 = por %p75, %p76
      %p78 = scmp.ne.s32.totalorder %s70, %s72
      %p79 = scmp.eq.s32.totalorder %s20, 1
      %p80 = por %p78, %p79
      %p81 = scmp.ne.s32.totalorder %s72, %s73
      %p82 = scmp.eq.s32.totalorder %s20, 0
      %p83 = por %p81, %p82
      %p84 = scmp.ne.s32.totalorder %s72, %s73
      %p85 = scmp.eq.s32.totalorder %s21, 1
      %p86 = por %p84, %p85
      %p88 = scmp.ne.s32.totalorder %s73, %s87
      %p89 = scmp.eq.s32.totalorder %s21, 0
      %p90 = por %p88, %p89
      %s92 = sadd.s32 %s91, 1
      %p95 = scmp.eq.s32.totalorder %s15, 1
      %p96 = scmp.ne.s32.totalorder %s91, %s93
      %p97 = scmp.eq.s32.totalorder %s15, 0
      %p98 = por %p96, %p97
      %p99 = scmp.ne.s32.totalorder %s91, %s93
      %p100 = scmp.eq.s32.totalorder %s20, 1
      %p101 = por %p99, %p100
      %p102 = scmp.ne.s32.totalorder %s93, %s94
      %p103 = scmp.eq.s32.totalorder %s20, 0
      %p104 = por %p102, %p103
      %p105 = scmp.ne.s32.totalorder %s93, %s94
      %p106 = scmp.eq.s32.totalorder %s21, 1
      %p107 = por %p105, %p106
      %p109 = scmp.ne.s32.totalorder %s94, %s108
      %p110 = scmp.eq.s32.totalorder %s21, 0
      %p111 = por %p109, %p110
      %s113 = sadd.s32 %s112, 1
      %p116 = scmp.eq.s32.totalorder %s15, 1
      %p117 = scmp.ne.s32.totalorder %s112, %s114
      %p118 = scmp.eq.s32.totalorder %s15, 0
      %p119 = por %p117, %p118
      %p120 = scmp.ne.s32.totalorder %s112, %s114
      %p121 = scmp.eq.s32.totalorder %s20, 1
      %p122 = por %p120, %p121
      %p123 = scmp.ne.s32.totalorder %s114, %s115
      %p124 = scmp.eq.s32.totalorder %s20, 0
      %p125 = por %p123, %p124
      %p126 = scmp.ne.s32.totalorder %s114, %s115
      %p127 = scmp.eq.s32.totalorder %s21, 1
      %p128 = por %p126, %p127
      %p130 = scmp.ne.s32.totalorder %s115, %s129
      %p131 = scmp.eq.s32.totalorder %s21, 0
      %p132 = por %p130, %p131
      %s133 = ssub.s32 %s15, %s22
      %p134 = scmp.eq.s32.totalorder %s133, 0
      %s136 = sadd.s32 %s135, 1
      %s137 = scalar_select %p134, %s135, %s136
      %p140 = pneg %p134
      %p141 = scmp.eq.s32.totalorder %s15, 1
      %p142 = por %p140, %p141
      %p143 = scmp.ne.s32.totalorder %s135, %s138
      %p144 = scmp.eq.s32.totalorder %s15, 0
      %p145 = por %p143, %p144
      %p146 = scmp.ne.s32.totalorder %s135, %s138
      %p147 = scmp.eq.s32.totalorder %s20, 1
      %p148 = por %p146, %p147
      %p149 = scmp.ne.s32.totalorder %s138, %s139
      %p150 = scmp.eq.s32.totalorder %s20, 0
      %p151 = por %p149, %p150
      %p152 = scmp.ne.s32.totalorder %s138, %s139
      %p153 = scmp.eq.s32.totalorder %s21, 1
      %p154 = por %p152, %p153
      %p156 = scmp.ne.s32.totalorder %s139, %s155
      %p157 = scmp.eq.s32.totalorder %s21, 0
      %p158 = por %p156, %p157
      %p159 = scmp.le.s32.totalorder 1, %s15
      %p160 = scmp.lt.s32.totalorder %s15, 3
      %p161 = pnand %p159, %p160
      %p162 = pneg %p161
      // Predicated region
      $region9: #{tpu_custom_call.1} parent=5 // pred_check
        _
      $region10: #{tpu_custom_call.1} parent=5 // pred_check_branch
        %164 = sbr.rel (%p161) target = $region12
      $region11: #{tpu_custom_call.1} parent=5 // pred_region
        %s165 = ssub.s32 %s15, 1
        // Predicated region
        $region13: #{tpu_custom_call.1} parent=11 // pred_check
          %p166 = pneg %p62
        $region14: #{tpu_custom_call.1} parent=11 // pred_check_branch
          %168 = sbr.rel (%p166) target = $region16
        $region15: #{tpu_custom_call.1} parent=11 // pred_region
          _
        $region16: #{tpu_custom_call.1} parent=11 // pred_fallthru
          _
        // Predicated region
        $region17: #{tpu_custom_call.1} parent=11 // pred_check
          %p169 = pneg %p83
        $region18: #{tpu_custom_call.1} parent=11 // pred_check_branch
          %171 = sbr.rel (%p169) target = $region20
        $region19: #{tpu_custom_call.1} parent=11 // pred_region
          _
        $region20: #{tpu_custom_call.1} parent=11 // pred_fallthru
          _
        // Predicated region
        $region21: #{tpu_custom_call.1} parent=11 // pred_check
          %p172 = pneg %p104
        $region22: #{tpu_custom_call.1} parent=11 // pred_check_branch
          %174 = sbr.rel (%p172) target = $region24
        $region23: #{tpu_custom_call.1} parent=11 // pred_region
          %s176 = ssub.s32 7168, 7168
          %177 = vsyncadd [#allocation3], %s176
          %s178 = sshll.u32 [#allocation2], 4
          %s179 = int_to_ptr.vmem [resolvable:$true] %s178
          %184 = dma.hbm_to_vmem [thread:$0]  %s3, 7168, %s179, [#allocation3], 448, 448, 28
        $region24: #{tpu_custom_call.1} parent=11 // pred_fallthru
          _
        // Predicated region
        $region25: #{tpu_custom_call.1} parent=11 // pred_check
          %p185 = pneg %p125
        $region26: #{tpu_custom_call.1} parent=11 // pred_check_branch
          %187 = sbr.rel (%p185) target = $region28
        $region27: #{tpu_custom_call.1} parent=11 // pred_region
          _
        $region28: #{tpu_custom_call.1} parent=11 // pred_fallthru
          _
      $region12: #{tpu_custom_call.1} parent=5 // pred_fallthru
        _
      %p188 = scmp.lt.s32.totalorder %s15, 2
      // Predicated region
      $region29: #{tpu_custom_call.1} parent=5 // pred_check
        %p189 = pneg %p188
      $region30: #{tpu_custom_call.1} parent=5 // pred_check_branch
        %191 = sbr.rel (%p189) target = $region32
      $region31: #{tpu_custom_call.1} parent=5 // pred_region
        // Predicated region
        $region33: #{tpu_custom_call.1} parent=31 // pred_check
          %p192 = pneg %p35
        $region34: #{tpu_custom_call.1} parent=31 // pred_check_branch
          %194 = sbr.rel (%p192) target = $region36
        $region35: #{tpu_custom_call.1} parent=31 // pred_region
          %s195 = smul.u32 16, %s15
          %p196 = scmp.lt.s32.totalorder %s195, 31
          %s197 = scalar_select %p196, %s195, 31
          %s198 = smul.addr %s197, 8
          %s199 = scalar_lea.vmem %s0, %s198
          %s200 = smul.u32 16, %s15
        $region36: #{tpu_custom_call.1} parent=31 // pred_fallthru
          _
      $region32: #{tpu_custom_call.1} parent=5 // pred_fallthru
        _
      %p201 = scmp.le.s32.totalorder 1, %s15
      %p202 = scmp.lt.s32.totalorder %s15, 3
      %p203 = pnand %p201, %p202
      %p204 = pneg %p203
      // Predicated region
      $region37: #{tpu_custom_call.1} parent=5 // pred_check
        _
      $region38: #{tpu_custom_call.1} parent=5 // pred_check_branch
        %206 = sbr.rel (%p203) target = $region40
      $region39: #{tpu_custom_call.1} parent=5 // pred_region
        %s207 = ssub.s32 %s15, 1
        // Predicated region
        $region41: #{tpu_custom_call.1} parent=39 // pred_check
          %p208 = pneg %p104
        $region42: #{tpu_custom_call.1} parent=39 // pred_check_branch
          %210 = sbr.rel (%p208) target = $region44
        $region43: #{tpu_custom_call.1} parent=39 // pred_region
          %211 = dma.done [#allocation3], 7168
        $region44: #{tpu_custom_call.1} parent=39 // pred_fallthru
          _
        %s212 = smul.u32 16, %s20
        %p213 = scmp.lt.s32.totalorder %s212, 31
        %s214 = scalar_select %p213, %s212, 31
        %s215 = smul.addr %s214, 8
        %s216 = scalar_lea.vmem %s0, %s215
        %p217 = pneg %p41
        %p218 = pneg %p38
        %p219 = pneg %p62
        %p220 = pneg %p59
        %p221 = pneg %p83
        %p222 = pneg %p80
        %p223 = pneg %p104
        %p224 = pneg %p101
        %p225 = pneg %p125
        %p226 = pneg %p122
        %p227 = pneg %p151
        %p228 = pneg %p148
        %s229 = sand.u32 %s138, 1
        %s230 = scalar_lea.sflag [#allocation4], %s229
        %s231 = sand.u32 %s138, 1
        %s232 = smul.addr %s231, 448
        %s233 = scalar_lea.vmem [#allocation5], %s232
        %s234 = smul.u32 16, %s20
        %p235 = scmp.lt.s32.totalorder %s234, 31
        %s236 = scalar_select %p235, %s234, 31
        %s237 = smul.addr %s236, 8
        %s238 = scalar_lea.vmem %s0, %s237
        %s239 = smul.u32 16, %s20
        %s240 = smul.u32 16, %s20
        %v242 = vld [vmem:[%s238] sm:$0xff]
        %v243 = vld [vmem:[%s238 + $0x8] sm:$0xff]
        %v244 = vld [vmem:[%s238 + $0x10] sm:$0xff]
        %v245 = vld [vmem:[%s238 + $0x18] sm:$0xff]
        %v246 = vld [vmem:[%s238 + $0x20] sm:$0xff]
        %v247 = vld [vmem:[%s238 + $0x28] sm:$0xff]
        %v248 = vld [vmem:[%s238 + $0x30] sm:$0xff]
        %v249 = vld [vmem:[%s238 + $0x38] sm:$0xff]
        %v250 = vld [vmem:[%s238 + $0x40] sm:$0xff]
        %v251 = vld [vmem:[%s238 + $0x48] sm:$0xff]
        %v252 = vld [vmem:[%s238 + $0x50] sm:$0xff]
        %v253 = vld [vmem:[%s238 + $0x58] sm:$0xff]
        %v254 = vld [vmem:[%s238 + $0x60] sm:$0xff]
        %v255 = vld [vmem:[%s238 + $0x68] sm:$0xff]
        %v256 = vld [vmem:[%s238 + $0x70] sm:$0xff]
        %v257 = vld [vmem:[%s238 + $0x78] sm:$0xff]
        %v258 = vpack.c.bf16 %v243, %v242
        %v259 = vpack.c.bf16 %v245, %v244
        %v260 = vpack.c.bf16 %v247, %v246
        %v261 = vpack.c.bf16 %v249, %v248
        %v262 = vpack.c.bf16 %v251, %v250
        %v263 = vpack.c.bf16 %v253, %v252
        %v264 = vpack.c.bf16 %v255, %v254
        %v265 = vpack.c.bf16 %v257, %v256
        %v266 = vld [vmem:[%s1] sm:$0xf]
        %v267 = vld [vmem:[%s1 + $0x4] sm:$0xf]
        %v268 = vld [vmem:[%s1 + $0x8] sm:$0xf]
        %v269 = vld [vmem:[%s1 + $0xc] sm:$0xf]
        %v270 = vld [vmem:[%s1 + $0x10] sm:$0xf]
        %v271 = vld [vmem:[%s1 + $0x14] sm:$0xf]
        %v272 = vld [vmem:[%s1 + $0x18] sm:$0xf]
        %v273 = vld [vmem:[%s1 + $0x1c] sm:$0xf]
        %v274 = vld [vmem:[%s2] sm:$0x1]
        %v276 = vlaneseq
        %v277 = vshrl.u32 %v276, 7
        %v278 = vsub.s32 0, %v277
        %v279 = vrot.slane %v274, %v278
        %v289 = vunpack.c.l.b16 %v266
        %v290 = vunpack.c.l.b16 %v267
        %v291 = vunpack.c.l.b16 %v268
        %v292 = vunpack.c.l.b16 %v269
        %v293 = vunpack.c.l.b16 %v270
        %v294 = vunpack.c.l.b16 %v271
        %v295 = vunpack.c.l.b16 %v272
        %v296 = vunpack.c.l.b16 %v273
        %v297 = vpack.c.b16 %v290, %v289
        %v298 = vpack.c.b16 %v292, %v291
        %v299 = vpack.c.b16 %v294, %v293
        %v300 = vpack.c.b16 %v296, %v295
        %vm305 = vcmask 523264
        %v307 = vsel %vm305, %v258, 0
        %v310 = vsel %vm305, %v259, 0
        %v313 = vsel %vm305, %v260, 0
        %v316 = vsel %vm305, %v261, 0
        %v319 = vsel %vm305, %v262, 0
        %v322 = vsel %vm305, %v263, 0
        %v325 = vsel %vm305, %v264, 0
        %v328 = vsel %vm305, %v265, 0
        %330 = vmatprep.subr.bf16.mxu0 0
        %331 = vmatpush1.bf16.msra.mxu0 0
        %332 = vmatprep.subr.bf16.mxu0 0
        %333 = vmatpush1.bf16.msra.mxu0 0
        %334 = vmatprep.subr.bf16.mxu0 0
        %335 = vmatpush1.bf16.msra.mxu0 0
        %336 = vmatprep.subr.bf16.mxu0 0
        %337 = vmatpush1.bf16.msra.mxu0 0
        %338 = vmatprep.subr.bf16.mxu0 0
        %339 = vmatpush1.bf16.msra.mxu0 %v300
        %340 = vmatprep.subr.bf16.mxu0 0
        %341 = vmatpush1.bf16.msra.mxu0 %v299
        %342 = vmatprep.subr.bf16.mxu0 0
        %343 = vmatpush1.bf16.msra.mxu0 %v298
        %344 = vmatprep.subr.bf16.mxu0 0
        %345 = vmatpush1.bf16.msra.mxu0 %v297
        %346 = vmatprep.subr.bf16.mxu0 0
        %347 = vmatpush2.bf16.msra.mxu0 0
        %348 = vmatprep.subr.bf16.mxu0 0
        %349 = vmatpush2.bf16.msra.mxu0 0
        %350 = vmatprep.subr.bf16.mxu0 0
        %351 = vmatpush2.bf16.msra.mxu0 0
        %352 = vmatprep.subr.bf16.mxu0 0
        %353 = vmatpush2.bf16.msra.mxu0 0
        %354 = vmatprep.subr.bf16.mxu0 0
        %355 = vmatpush2.bf16.msra.mxu0 0
        %356 = vmatprep.subr.bf16.mxu0 0
        %357 = vmatpush2.bf16.msra.mxu0 0
        %358 = vmatprep.subr.bf16.mxu0 0
        %359 = vmatpush2.bf16.msra.mxu0 0
        %360 = vmatprep.subr.bf16.mxu0 0
        %361 = vmatpush2.bf16.msra.mxu0 0
        %362 = vmatprep.mubr.bf16.mxu0 0
        %363 = vmatmul.mubr.bf16.gmra.mxu0 %v307
        %v364 = vpop.f32.mrf.mxu0
        %v365 = vadd.f32 %v279, %v364
        %v366 = vpop.f32.mrf.mxu0
        %v367 = vpop.f32.mrf.mxu0
        %v368 = vadd.f32 %v279, %v367
        %v369 = vpop.f32.mrf.mxu0
        %370 = vmatprep.mubr.bf16.mxu0 0
        %371 = vmatmul.mubr.bf16.gmra.mxu0 %v310
        %v372 = vpop.f32.mrf.mxu0
        %v373 = vadd.f32 %v279, %v372
        %v374 = vpop.f32.mrf.mxu0
        %v375 = vpop.f32.mrf.mxu0
        %v376 = vadd.f32 %v279, %v375
        %v377 = vpop.f32.mrf.mxu0
        %378 = vmatprep.mubr.bf16.mxu0 0
        %379 = vmatmul.mubr.bf16.gmra.mxu0 %v313
        %v380 = vpop.f32.mrf.mxu0
        %v381 = vadd.f32 %v279, %v380
        %v382 = vpop.f32.mrf.mxu0
        %v383 = vpop.f32.mrf.mxu0
        %v384 = vadd.f32 %v279, %v383
        %v385 = vpop.f32.mrf.mxu0
        %386 = vmatprep.mubr.bf16.mxu0 0
        %387 = vmatmul.mubr.bf16.gmra.mxu0 %v316
        %v388 = vpop.f32.mrf.mxu0
        %v389 = vadd.f32 %v279, %v388
        %v390 = vpop.f32.mrf.mxu0
        %v391 = vpop.f32.mrf.mxu0
        %v392 = vadd.f32 %v279, %v391
        %v393 = vpop.f32.mrf.mxu0
        %394 = vmatprep.mubr.bf16.mxu0 0
        %395 = vmatmul.mubr.bf16.gmra.mxu0 %v319
        %v396 = vpop.f32.mrf.mxu0
        %v397 = vadd.f32 %v279, %v396
        %v398 = vpop.f32.mrf.mxu0
        %v399 = vpop.f32.mrf.mxu0
        %v400 = vadd.f32 %v279, %v399
        %v401 = vpop.f32.mrf.mxu0
        %402 = vmatprep.mubr.bf16.mxu0 0
        %403 = vmatmul.mubr.bf16.gmra.mxu0 %v322
        %v404 = vpop.f32.mrf.mxu0
        %v405 = vadd.f32 %v279, %v404
        %v406 = vpop.f32.mrf.mxu0
        %v407 = vpop.f32.mrf.mxu0
        %v408 = vadd.f32 %v279, %v407
        %v409 = vpop.f32.mrf.mxu0
        %410 = vmatprep.mubr.bf16.mxu0 0
        %411 = vmatmul.mubr.bf16.gmra.mxu0 %v325
        %v412 = vpop.f32.mrf.mxu0
        %v413 = vadd.f32 %v279, %v412
        %v414 = vpop.f32.mrf.mxu0
        %v415 = vpop.f32.mrf.mxu0
        %v416 = vadd.f32 %v279, %v415
        %v417 = vpop.f32.mrf.mxu0
        %418 = vmatprep.mubr.bf16.mxu0 0
        %419 = vmatmul.mubr.bf16.gmra.mxu0 %v328
        %v420 = vpop.f32.mrf.mxu0
        %v421 = vadd.f32 %v279, %v420
        %v422 = vpop.f32.mrf.mxu0
        %v423 = vpop.f32.mrf.mxu0
        %v424 = vadd.f32 %v279, %v423
        %v425 = vpop.f32.mrf.mxu0
        %426 = vdwg.mxu0
        %vm427 = vcmp.gt.f32.partialorder %v365, 0.0
        %vm428 = vcmp.gt.f32.partialorder %v368, 0.0
        %vm429 = vcmp.gt.f32.partialorder %v373, 0.0
        %vm430 = vcmp.gt.f32.partialorder %v376, 0.0
        %vm431 = vcmp.gt.f32.partialorder %v381, 0.0
        %vm432 = vcmp.gt.f32.partialorder %v384, 0.0
        %vm433 = vcmp.gt.f32.partialorder %v389, 0.0
        %vm434 = vcmp.gt.f32.partialorder %v392, 0.0
        %vm435 = vcmp.gt.f32.partialorder %v397, 0.0
        %vm436 = vcmp.gt.f32.partialorder %v400, 0.0
        %vm437 = vcmp.gt.f32.partialorder %v405, 0.0
        %vm438 = vcmp.gt.f32.partialorder %v408, 0.0
        %vm439 = vcmp.gt.f32.partialorder %v413, 0.0
        %vm440 = vcmp.gt.f32.partialorder %v416, 0.0
        %vm441 = vcmp.gt.f32.partialorder %v421, 0.0
        %vm442 = vcmp.gt.f32.partialorder %v424, 0.0
        %v443 = vmul.f32 %v365, 0.1
        %v444 = vmul.f32 %v368, 0.1
        %v445 = vmul.f32 %v373, 0.1
        %v446 = vmul.f32 %v376, 0.1
        %v447 = vmul.f32 %v381, 0.1
        %v448 = vmul.f32 %v384, 0.1
        %v449 = vmul.f32 %v389, 0.1
        %v450 = vmul.f32 %v392, 0.1
        %v451 = vmul.f32 %v397, 0.1
        %v452 = vmul.f32 %v400, 0.1
        %v453 = vmul.f32 %v405, 0.1
        %v454 = vmul.f32 %v408, 0.1
        %v455 = vmul.f32 %v413, 0.1
        %v456 = vmul.f32 %v416, 0.1
        %v457 = vmul.f32 %v421, 0.1
        %v458 = vmul.f32 %v424, 0.1
        %v459 = vsel %vm427, %v365, %v443
        %v460 = vsel %vm428, %v368, %v444
        %v461 = vsel %vm429, %v373, %v445
        %v462 = vsel %vm430, %v376, %v446
        %v463 = vsel %vm431, %v381, %v447
        %v464 = vsel %vm432, %v384, %v448
        %v465 = vsel %vm433, %v389, %v449
        %v466 = vsel %vm434, %v392, %v450
        %v467 = vsel %vm435, %v397, %v451
        %v468 = vsel %vm436, %v400, %v452
        %v469 = vsel %vm437, %v405, %v453
        %v470 = vsel %vm438, %v408, %v454
        %v471 = vsel %vm439, %v413, %v455
        %v472 = vsel %vm440, %v416, %v456
        %v473 = vsel %vm441, %v421, %v457
        %v474 = vsel %vm442, %v424, %v458
        %v475 = vpack.c.bf16 %v460, %v459
        %v476 = vpack.c.bf16 %v462, %v461
        %v477 = vpack.c.bf16 %v464, %v463
        %v478 = vpack.c.bf16 %v466, %v465
        %v479 = vpack.c.bf16 %v468, %v467
        %v480 = vpack.c.bf16 %v470, %v469
        %v481 = vpack.c.bf16 %v472, %v471
        %v482 = vpack.c.bf16 %v474, %v473
        %v483 = vld [vmem:[#allocation2] sm:$0xff]
        %v484 = vld [vmem:[#allocation2 + $0x8] sm:$0xff]
        %v485 = vld [vmem:[#allocation2 + $0x10] sm:$0xff]
        %v486 = vld [vmem:[#allocation2 + $0x18] sm:$0xf]
        %v487 = vld [vmem:[#allocation2 + $0x1c] sm:$0xff]
        %v488 = vld [vmem:[#allocation2 + $0x24] sm:$0xff]
        %v489 = vld [vmem:[#allocation2 + $0x2c] sm:$0xff]
        %v490 = vld [vmem:[#allocation2 + $0x34] sm:$0xf]
        %v491 = vld [vmem:[#allocation2 + $0x38] sm:$0xff]
        %v492 = vld [vmem:[#allocation2 + $0x40] sm:$0xff]
        %v493 = vld [vmem:[#allocation2 + $0x48] sm:$0xff]
        %v494 = vld [vmem:[#allocation2 + $0x50] sm:$0xf]
        %v495 = vld [vmem:[#allocation2 + $0x54] sm:$0xff]
        %v496 = vld [vmem:[#allocation2 + $0x5c] sm:$0xff]
        %v497 = vld [vmem:[#allocation2 + $0x64] sm:$0xff]
        %v498 = vld [vmem:[#allocation2 + $0x6c] sm:$0xf]
        %v499 = vld [vmem:[#allocation2 + $0x70] sm:$0xff]
        %v500 = vld [vmem:[#allocation2 + $0x78] sm:$0xff]
        %v501 = vld [vmem:[#allocation2 + $0x80] sm:$0xff]
        %v502 = vld [vmem:[#allocation2 + $0x88] sm:$0xf]
        %v503 = vld [vmem:[#allocation2 + $0x8c] sm:$0xff]
        %v504 = vld [vmem:[#allocation2 + $0x94] sm:$0xff]
        %v505 = vld [vmem:[#allocation2 + $0x9c] sm:$0xff]
        %v506 = vld [vmem:[#allocation2 + $0xa4] sm:$0xf]
        %v507 = vld [vmem:[#allocation2 + $0xa8] sm:$0xff]
        %v508 = vld [vmem:[#allocation2 + $0xb0] sm:$0xff]
        %v509 = vld [vmem:[#allocation2 + $0xb8] sm:$0xff]
        %v510 = vld [vmem:[#allocation2 + $0xc0] sm:$0xf]
        %v511 = vld [vmem:[#allocation2 + $0xc4] sm:$0xff]
        %v512 = vld [vmem:[#allocation2 + $0xcc] sm:$0xff]
        %v513 = vld [vmem:[#allocation2 + $0xd4] sm:$0xff]
        %v514 = vld [vmem:[#allocation2 + $0xdc] sm:$0xf]
        %v515 = vld [vmem:[#allocation2 + $0xe0] sm:$0xff]
        %v516 = vld [vmem:[#allocation2 + $0xe8] sm:$0xff]
        %v517 = vld [vmem:[#allocation2 + $0xf0] sm:$0xff]
        %v518 = vld [vmem:[#allocation2 + $0xf8] sm:$0xf]
        %v519 = vld [vmem:[#allocation2 + $0xfc] sm:$0xff]
        %v520 = vld [vmem:[#allocation2 + $0x104] sm:$0xff]
        %v521 = vld [vmem:[#allocation2 + $0x10c] sm:$0xff]
        %v522 = vld [vmem:[#allocation2 + $0x114] sm:$0xf]
        %v523 = vld [vmem:[#allocation2 + $0x118] sm:$0xff]
        %v524 = vld [vmem:[#allocation2 + $0x120] sm:$0xff]
        %v525 = vld [vmem:[#allocation2 + $0x128] sm:$0xff]
        %v526 = vld [vmem:[#allocation2 + $0x130] sm:$0xf]
        %v527 = vld [vmem:[#allocation2 + $0x134] sm:$0xff]
        %v528 = vld [vmem:[#allocation2 + $0x13c] sm:$0xff]
        %v529 = vld [vmem:[#allocation2 + $0x144] sm:$0xff]
        %v530 = vld [vmem:[#allocation2 + $0x14c] sm:$0xf]
        %v531 = vld [vmem:[#allocation2 + $0x150] sm:$0xff]
        %v532 = vld [vmem:[#allocation2 + $0x158] sm:$0xff]
        %v533 = vld [vmem:[#allocation2 + $0x160] sm:$0xff]
        %v534 = vld [vmem:[#allocation2 + $0x168] sm:$0xf]
        %v535 = vld [vmem:[#allocation2 + $0x16c] sm:$0xff]
        %v536 = vld [vmem:[#allocation2 + $0x174] sm:$0xff]
        %v537 = vld [vmem:[#allocation2 + $0x17c] sm:$0xff]
        %v538 = vld [vmem:[#allocation2 + $0x184] sm:$0xf]
        %v539 = vld [vmem:[#allocation2 + $0x188] sm:$0xff]
        %v540 = vld [vmem:[#allocation2 + $0x190] sm:$0xff]
        %v541 = vld [vmem:[#allocation2 + $0x198] sm:$0xff]
        %v542 = vld [vmem:[#allocation2 + $0x1a0] sm:$0xf]
        %v543 = vld [vmem:[#allocation2 + $0x1a4] sm:$0xff]
        %v544 = vld [vmem:[#allocation2 + $0x1ac] sm:$0xff]
        %v545 = vld [vmem:[#allocation2 + $0x1b4] sm:$0xff]
        %v546 = vld [vmem:[#allocation2 + $0x1bc] sm:$0xf]
        %v547 = vld [vmem:[%s4] sm:$0xff]
        %v549 = vlaneseq
        %v550 = vshrl.u32 %v549, 7
        %v551 = vsub.s32 0, %v550
        %v552 = vrot.slane %v547, %v551
        %v553 = vlaneseq
        %v554 = vshrl.u32 %v553, 7
        %v555 = vsub.s32 1, %v554
        %v556 = vrot.slane %v547, %v555
        %v557 = vlaneseq
        %v558 = vshrl.u32 %v557, 7
        %v559 = vsub.s32 2, %v558
        %v560 = vrot.slane %v547, %v559
        %v561 = vlaneseq
        %v562 = vshrl.u32 %v561, 7
        %v563 = vsub.s32 3, %v562
        %v564 = vrot.slane %v547, %v563
        %v565 = vlaneseq
        %v566 = vshrl.u32 %v565, 7
        %v567 = vsub.s32 4, %v566
        %v568 = vrot.slane %v547, %v567
        %v569 = vlaneseq
        %v570 = vshrl.u32 %v569, 7
        %v571 = vsub.s32 5, %v570
        %v572 = vrot.slane %v547, %v571
        %v573 = vlaneseq
        %v574 = vshrl.u32 %v573, 7
        %v575 = vsub.s32 6, %v574
        %v576 = vrot.slane %v547, %v575
        %v648 = vunpack.c.l.b16 %v483
        %v649 = vunpack.c.h.b16 %v483
        %v650 = vunpack.c.l.b16 %v484
        %v651 = vunpack.c.h.b16 %v484
        %v652 = vunpack.c.l.b16 %v485
        %v653 = vunpack.c.h.b16 %v485
        %v654 = vunpack.c.l.b16 %v486
        %v655 = vunpack.c.l.b16 %v487
        %v656 = vunpack.c.h.b16 %v487
        %v657 = vunpack.c.l.b16 %v488
        %v658 = vunpack.c.h.b16 %v488
        %v659 = vunpack.c.l.b16 %v489
        %v660 = vunpack.c.h.b16 %v489
        %v661 = vunpack.c.l.b16 %v490
        %v662 = vunpack.c.l.b16 %v491
        %v663 = vunpack.c.h.b16 %v491
        %v664 = vunpack.c.l.b16 %v492
        %v665 = vunpack.c.h.b16 %v492
        %v666 = vunpack.c.l.b16 %v493
        %v667 = vunpack.c.h.b16 %v493
        %v668 = vunpack.c.l.b16 %v494
        %v669 = vunpack.c.l.b16 %v495
        %v670 = vunpack.c.h.b16 %v495
        %v671 = vunpack.c.l.b16 %v496
        %v672 = vunpack.c.h.b16 %v496
        %v673 = vunpack.c.l.b16 %v497
        %v674 = vunpack.c.h.b16 %v497
        %v675 = vunpack.c.l.b16 %v498
        %v676 = vunpack.c.l.b16 %v499
        %v677 = vunpack.c.h.b16 %v499
        %v678 = vunpack.c.l.b16 %v500
        %v679 = vunpack.c.h.b16 %v500
        %v680 = vunpack.c.l.b16 %v501
        %v681 = vunpack.c.h.b16 %v501
        %v682 = vunpack.c.l.b16 %v502
        %v683 = vunpack.c.l.b16 %v503
        %v684 = vunpack.c.h.b16 %v503
        %v685 = vunpack.c.l.b16 %v504
        %v686 = vunpack.c.h.b16 %v504
        %v687 = vunpack.c.l.b16 %v505
        %v688 = vunpack.c.h.b16 %v505
        %v689 = vunpack.c.l.b16 %v506
        %v690 = vunpack.c.l.b16 %v507
        %v691 = vunpack.c.h.b16 %v507
        %v692 = vunpack.c.l.b16 %v508
        %v693 = vunpack.c.h.b16 %v508
        %v694 = vunpack.c.l.b16 %v509
        %v695 = vunpack.c.h.b16 %v509
        %v696 = vunpack.c.l.b16 %v510
        %v697 = vunpack.c.l.b16 %v511
        %v698 = vunpack.c.h.b16 %v511
        %v699 = vunpack.c.l.b16 %v512
        %v700 = vunpack.c.h.b16 %v512
        %v701 = vunpack.c.l.b16 %v513
        %v702 = vunpack.c.h.b16 %v513
        %v703 = vunpack.c.l.b16 %v514
        %v704 = vunpack.c.l.b16 %v515
        %v705 = vunpack.c.h.b16 %v515
        %v706 = vunpack.c.l.b16 %v516
        %v707 = vunpack.c.h.b16 %v516
        %v708 = vunpack.c.l.b16 %v517
        %v709 = vunpack.c.h.b16 %v517
        %v710 = vunpack.c.l.b16 %v518
        %v711 = vunpack.c.l.b16 %v519
        %v712 = vunpack.c.h.b16 %v519
        %v713 = vunpack.c.l.b16 %v520
        %v714 = vunpack.c.h.b16 %v520
        %v715 = vunpack.c.l.b16 %v521
        %v716 = vunpack.c.h.b16 %v521
        %v717 = vunpack.c.l.b16 %v522
        %v718 = vunpack.c.l.b16 %v523
        %v719 = vunpack.c.h.b16 %v523
        %v720 = vunpack.c.l.b16 %v524
        %v721 = vunpack.c.h.b16 %v524
        %v722 = vunpack.c.l.b16 %v525
        %v723 = vunpack.c.h.b16 %v525
        %v724 = vunpack.c.l.b16 %v526
        %v725 = vunpack.c.l.b16 %v527
        %v726 = vunpack.c.h.b16 %v527
        %v727 = vunpack.c.l.b16 %v528
        %v728 = vunpack.c.h.b16 %v528
        %v729 = vunpack.c.l.b16 %v529
        %v730 = vunpack.c.h.b16 %v529
        %v731 = vunpack.c.l.b16 %v530
        %v732 = vunpack.c.l.b16 %v531
        %v733 = vunpack.c.h.b16 %v531
        %v734 = vunpack.c.l.b16 %v532
        %v735 = vunpack.c.h.b16 %v532
        %v736 = vunpack.c.l.b16 %v533
        %v737 = vunpack.c.h.b16 %v533
        %v738 = vunpack.c.l.b16 %v534
        %v739 = vunpack.c.l.b16 %v535
        %v740 = vunpack.c.h.b16 %v535
        %v741 = vunpack.c.l.b16 %v536
        %v742 = vunpack.c.h.b16 %v536
        %v743 = vunpack.c.l.b16 %v537
        %v744 = vunpack.c.h.b16 %v537
        %v745 = vunpack.c.l.b16 %v538
        %v746 = vunpack.c.l.b16 %v539
        %v747 = vunpack.c.h.b16 %v539
        %v748 = vunpack.c.l.b16 %v540
        %v749 = vunpack.c.h.b16 %v540
        %v750 = vunpack.c.l.b16 %v541
        %v751 = vunpack.c.h.b16 %v541
        %v752 = vunpack.c.l.b16 %v542
        %v753 = vunpack.c.l.b16 %v543
        %v754 = vunpack.c.h.b16 %v543
        %v755 = vunpack.c.l.b16 %v544
        %v756 = vunpack.c.h.b16 %v544
        %v757 = vunpack.c.l.b16 %v545
        %v758 = vunpack.c.h.b16 %v545
        %v759 = vunpack.c.l.b16 %v546
        %v760 = vpack.c.b16 %v655, %v648
        %v761 = vpack.c.b16 %v656, %v649
        %v762 = vpack.c.b16 %v657, %v650
        %v763 = vpack.c.b16 %v658, %v651
        %v764 = vpack.c.b16 %v659, %v652
        %v765 = vpack.c.b16 %v660, %v653
        %v766 = vpack.c.b16 %v661, %v654
        %v767 = vpack.c.b16 %v669, %v662
        %v768 = vpack.c.b16 %v670, %v663
        %v769 = vpack.c.b16 %v671, %v664
        %v770 = vpack.c.b16 %v672, %v665
        %v771 = vpack.c.b16 %v673, %v666
        %v772 = vpack.c.b16 %v674, %v667
        %v773 = vpack.c.b16 %v675, %v668
        %v774 = vpack.c.b16 %v683, %v676
        %v775 = vpack.c.b16 %v684, %v677
        %v776 = vpack.c.b16 %v685, %v678
        %v777 = vpack.c.b16 %v686, %v679
        %v778 = vpack.c.b16 %v687, %v680
        %v779 = vpack.c.b16 %v688, %v681
        %v780 = vpack.c.b16 %v689, %v682
        %v781 = vpack.c.b16 %v697, %v690
        %v782 = vpack.c.b16 %v698, %v691
        %v783 = vpack.c.b16 %v699, %v692
        %v784 = vpack.c.b16 %v700, %v693
        %v785 = vpack.c.b16 %v701, %v694
        %v786 = vpack.c.b16 %v702, %v695
        %v787 = vpack.c.b16 %v703, %v696
        %v788 = vpack.c.b16 %v711, %v704
        %v789 = vpack.c.b16 %v712, %v705
        %v790 = vpack.c.b16 %v713, %v706
        %v791 = vpack.c.b16 %v714, %v707
        %v792 = vpack.c.b16 %v715, %v708
        %v793 = vpack.c.b16 %v716, %v709
        %v794 = vpack.c.b16 %v717, %v710
        %v795 = vpack.c.b16 %v725, %v718
        %v796 = vpack.c.b16 %v726, %v719
        %v797 = vpack.c.b16 %v727, %v720
        %v798 = vpack.c.b16 %v728, %v721
        %v799 = vpack.c.b16 %v729, %v722
        %v800 = vpack.c.b16 %v730, %v723
        %v801 = vpack.c.b16 %v731, %v724
        %v802 = vpack.c.b16 %v739, %v732
        %v803 = vpack.c.b16 %v740, %v733
        %v804 = vpack.c.b16 %v741, %v734
        %v805 = vpack.c.b16 %v742, %v735
        %v806 = vpack.c.b16 %v743, %v736
        %v807 = vpack.c.b16 %v744, %v737
        %v808 = vpack.c.b16 %v745, %v738
        %v809 = vpack.c.b16 %v753, %v746
        %v810 = vpack.c.b16 %v754, %v747
        %v811 = vpack.c.b16 %v755, %v748
        %v812 = vpack.c.b16 %v756, %v749
        %v813 = vpack.c.b16 %v757, %v750
        %v814 = vpack.c.b16 %v758, %v751
        %v815 = vpack.c.b16 %v759, %v752
        %872 = vmatprep.subr.bf16.mxu0 %v810
        %873 = vmatpush1.bf16.msra.mxu0 %v809
        %874 = vmatprep.subr.bf16.mxu0 %v803
        %875 = vmatpush1.bf16.msra.mxu0 %v802
        %876 = vmatprep.subr.bf16.mxu0 %v796
        %877 = vmatpush1.bf16.msra.mxu0 %v795
        %878 = vmatprep.subr.bf16.mxu0 %v789
        %879 = vmatpush1.bf16.msra.mxu0 %v788
        %880 = vmatprep.subr.bf16.mxu0 %v782
        %881 = vmatpush1.bf16.msra.mxu0 %v781
        %882 = vmatprep.subr.bf16.mxu0 %v775
        %883 = vmatpush1.bf16.msra.mxu0 %v774
        %884 = vmatprep.subr.bf16.mxu0 %v768
        %885 = vmatpush1.bf16.msra.mxu0 %v767
        %886 = vmatprep.subr.bf16.mxu0 %v761
        %887 = vmatpush1.bf16.msra.mxu0 %v760
        %888 = vmatprep.subr.bf16.mxu0 0
        %889 = vmatpush2.bf16.msra.mxu0 0
        %890 = vmatprep.subr.bf16.mxu0 0
        %891 = vmatpush2.bf16.msra.mxu0 0
        %892 = vmatprep.subr.bf16.mxu0 0
        %893 = vmatpush2.bf16.msra.mxu0 0
        %894 = vmatprep.subr.bf16.mxu0 0
        %895 = vmatpush2.bf16.msra.mxu0 0
        %896 = vmatprep.subr.bf16.mxu0 0
        %897 = vmatpush2.bf16.msra.mxu0 0
        %898 = vmatprep.subr.bf16.mxu0 0
        %899 = vmatpush2.bf16.msra.mxu0 0
        %900 = vmatprep.subr.bf16.mxu0 0
        %901 = vmatpush2.bf16.msra.mxu0 0
        %902 = vmatprep.subr.bf16.mxu0 0
        %903 = vmatpush2.bf16.msra.mxu0 0
        %904 = vmatprep.mubr.bf16.mxu0 0
        %905 = vmatmul.mubr.bf16.gmra.mxu0 %v475
        %v906 = vpop.f32.mrf.mxu0
        %v907 = vadd.f32 %v552, %v906
        %v908 = vpop.f32.mrf.mxu0
        %v909 = vadd.f32 %v556, %v908
        %v910 = vpop.f32.mrf.mxu0
        %v911 = vadd.f32 %v552, %v910
        %v912 = vpop.f32.mrf.mxu0
        %v913 = vadd.f32 %v556, %v912
        %914 = vmatprep.mubr.bf16.mxu0 0
        %915 = vmatmul.mubr.bf16.gmra.mxu0 %v476
        %v916 = vpop.f32.mrf.mxu0
        %v917 = vadd.f32 %v552, %v916
        %v918 = vpop.f32.mrf.mxu0
        %v919 = vadd.f32 %v556, %v918
        %v920 = vpop.f32.mrf.mxu0
        %v921 = vadd.f32 %v552, %v920
        %v922 = vpop.f32.mrf.mxu0
        %v923 = vadd.f32 %v556, %v922
        %924 = vmatprep.mubr.bf16.mxu0 0
        %925 = vmatmul.mubr.bf16.gmra.mxu0 %v477
        %v926 = vpop.f32.mrf.mxu0
        %v927 = vadd.f32 %v552, %v926
        %v928 = vpop.f32.mrf.mxu0
        %v929 = vadd.f32 %v556, %v928
        %v930 = vpop.f32.mrf.mxu0
        %v931 = vadd.f32 %v552, %v930
        %v932 = vpop.f32.mrf.mxu0
        %v933 = vadd.f32 %v556, %v932
        %934 = vmatprep.mubr.bf16.mxu0 0
        %935 = vmatmul.mubr.bf16.gmra.mxu0 %v478
        %v936 = vpop.f32.mrf.mxu0
        %v937 = vadd.f32 %v552, %v936
        %v938 = vpop.f32.mrf.mxu0
        %v939 = vadd.f32 %v556, %v938
        %v940 = vpop.f32.mrf.mxu0
        %v941 = vadd.f32 %v552, %v940
        %v942 = vpop.f32.mrf.mxu0
        %v943 = vadd.f32 %v556, %v942
        %944 = vmatprep.mubr.bf16.mxu0 0
        %945 = vmatmul.mubr.bf16.gmra.mxu0 %v479
        %v946 = vpop.f32.mrf.mxu0
        %v947 = vadd.f32 %v552, %v946
        %v948 = vpop.f32.mrf.mxu0
        %v949 = vadd.f32 %v556, %v948
        %v950 = vpop.f32.mrf.mxu0
        %v951 = vadd.f32 %v552, %v950
        %v952 = vpop.f32.mrf.mxu0
        %v953 = vadd.f32 %v556, %v952
        %954 = vmatprep.mubr.bf16.mxu0 0
        %955 = vmatmul.mubr.bf16.gmra.mxu0 %v480
        %v956 = vpop.f32.mrf.mxu0
        %v957 = vadd.f32 %v552, %v956
        %v958 = vpop.f32.mrf.mxu0
        %v959 = vadd.f32 %v556, %v958
        %v960 = vpop.f32.mrf.mxu0
        %v961 = vadd.f32 %v552, %v960
        %v962 = vpop.f32.mrf.mxu0
        %v963 = vadd.f32 %v556, %v962
        %964 = vmatprep.mubr.bf16.mxu0 0
        %965 = vmatmul.mubr.bf16.gmra.mxu0 %v481
        %v966 = vpop.f32.mrf.mxu0
        %v967 = vadd.f32 %v552, %v966
        %v968 = vpop.f32.mrf.mxu0
        %v969 = vadd.f32 %v556, %v968
        %v970 = vpop.f32.mrf.mxu0
        %v971 = vadd.f32 %v552, %v970
        %v972 = vpop.f32.mrf.mxu0
        %v973 = vadd.f32 %v556, %v972
        %974 = vmatprep.mubr.bf16.mxu0 0
        %975 = vmatmul.mubr.bf16.gmra.mxu0 %v482
        %v976 = vpop.f32.mrf.mxu0
        %v977 = vadd.f32 %v552, %v976
        %v978 = vpop.f32.mrf.mxu0
        %v979 = vadd.f32 %v556, %v978
        %v980 = vpop.f32.mrf.mxu0
        %v981 = vadd.f32 %v552, %v980
        %v982 = vpop.f32.mrf.mxu0
        %v983 = vadd.f32 %v556, %v982
        %984 = vdwg.mxu0
        %985 = vmatprep.subr.bf16.mxu0 %v812
        %986 = vmatpush1.bf16.msra.mxu0 %v811
        %987 = vmatprep.subr.bf16.mxu0 %v805
        %988 = vmatpush1.bf16.msra.mxu0 %v804
        %989 = vmatprep.subr.bf16.mxu0 %v798
        %990 = vmatpush1.bf16.msra.mxu0 %v797
        %991 = vmatprep.subr.bf16.mxu0 %v791
        %992 = vmatpush1.bf16.msra.mxu0 %v790
        %993 = vmatprep.subr.bf16.mxu0 %v784
        %994 = vmatpush1.bf16.msra.mxu0 %v783
        %995 = vmatprep.subr.bf16.mxu0 %v777
        %996 = vmatpush1.bf16.msra.mxu0 %v776
        %997 = vmatprep.subr.bf16.mxu0 %v770
        %998 = vmatpush1.bf16.msra.mxu0 %v769
        %999 = vmatprep.subr.bf16.mxu0 %v763
        %1000 = vmatpush1.bf16.msra.mxu0 %v762
        %1001 = vmatprep.subr.bf16.mxu0 0
        %1002 = vmatpush2.bf16.msra.mxu0 0
        %1003 = vmatprep.subr.bf16.mxu0 0
        %1004 = vmatpush2.bf16.msra.mxu0 0
        %1005 = vmatprep.subr.bf16.mxu0 0
        %1006 = vmatpush2.bf16.msra.mxu0 0
        %1007 = vmatprep.subr.bf16.mxu0 0
        %1008 = vmatpush2.bf16.msra.mxu0 0
        %1009 = vmatprep.subr.bf16.mxu0 0
        %1010 = vmatpush2.bf16.msra.mxu0 0
        %1011 = vmatprep.subr.bf16.mxu0 0
        %1012 = vmatpush2.bf16.msra.mxu0 0
        %1013 = vmatprep.subr.bf16.mxu0 0
        %1014 = vmatpush2.bf16.msra.mxu0 0
        %1015 = vmatprep.subr.bf16.mxu0 0
        %1016 = vmatpush2.bf16.msra.mxu0 0
        %1017 = vmatprep.mubr.bf16.mxu0 0
        %1018 = vmatmul.mubr.bf16.gmra.mxu0 %v475
        %v1019 = vpop.f32.mrf.mxu0
        %v1020 = vadd.f32 %v560, %v1019
        %v1021 = vpop.f32.mrf.mxu0
        %v1022 = vadd.f32 %v564, %v1021
        %v1023 = vpop.f32.mrf.mxu0
        %v1024 = vadd.f32 %v560, %v1023
        %v1025 = vpop.f32.mrf.mxu0
        %v1026 = vadd.f32 %v564, %v1025
        %1027 = vmatprep.mubr.bf16.mxu0 0
        %1028 = vmatmul.mubr.bf16.gmra.mxu0 %v476
        %v1029 = vpop.f32.mrf.mxu0
        %v1030 = vadd.f32 %v560, %v1029
        %v1031 = vpop.f32.mrf.mxu0
        %v1032 = vadd.f32 %v564, %v1031
        %v1033 = vpop.f32.mrf.mxu0
        %v1034 = vadd.f32 %v560, %v1033
        %v1035 = vpop.f32.mrf.mxu0
        %v1036 = vadd.f32 %v564, %v1035
        %1037 = vmatprep.mubr.bf16.mxu0 0
        %1038 = vmatmul.mubr.bf16.gmra.mxu0 %v477
        %v1039 = vpop.f32.mrf.mxu0
        %v1040 = vadd.f32 %v560, %v1039
        %v1041 = vpop.f32.mrf.mxu0
        %v1042 = vadd.f32 %v564, %v1041
        %v1043 = vpop.f32.mrf.mxu0
        %v1044 = vadd.f32 %v560, %v1043
        %v1045 = vpop.f32.mrf.mxu0
        %v1046 = vadd.f32 %v564, %v1045
        %1047 = vmatprep.mubr.bf16.mxu0 0
        %1048 = vmatmul.mubr.bf16.gmra.mxu0 %v478
        %v1049 = vpop.f32.mrf.mxu0
        %v1050 = vadd.f32 %v560, %v1049
        %v1051 = vpop.f32.mrf.mxu0
        %v1052 = vadd.f32 %v564, %v1051
        %v1053 = vpop.f32.mrf.mxu0
        %v1054 = vadd.f32 %v560, %v1053
        %v1055 = vpop.f32.mrf.mxu0
        %v1056 = vadd.f32 %v564, %v1055
        %1057 = vmatprep.mubr.bf16.mxu0 0
        %1058 = vmatmul.mubr.bf16.gmra.mxu0 %v479
        %v1059 = vpop.f32.mrf.mxu0
        %v1060 = vadd.f32 %v560, %v1059
        %v1061 = vpop.f32.mrf.mxu0
        %v1062 = vadd.f32 %v564, %v1061
        %v1063 = vpop.f32.mrf.mxu0
        %v1064 = vadd.f32 %v560, %v1063
        %v1065 = vpop.f32.mrf.mxu0
        %v1066 = vadd.f32 %v564, %v1065
        %1067 = vmatprep.mubr.bf16.mxu0 0
        %1068 = vmatmul.mubr.bf16.gmra.mxu0 %v480
        %v1069 = vpop.f32.mrf.mxu0
        %v1070 = vadd.f32 %v560, %v1069
        %v1071 = vpop.f32.mrf.mxu0
        %v1072 = vadd.f32 %v564, %v1071
        %v1073 = vpop.f32.mrf.mxu0
        %v1074 = vadd.f32 %v560, %v1073
        %v1075 = vpop.f32.mrf.mxu0
        %v1076 = vadd.f32 %v564, %v1075
        %1077 = vmatprep.mubr.bf16.mxu0 0
        %1078 = vmatmul.mubr.bf16.gmra.mxu0 %v481
        %v1079 = vpop.f32.mrf.mxu0
        %v1080 = vadd.f32 %v560, %v1079
        %v1081 = vpop.f32.mrf.mxu0
        %v1082 = vadd.f32 %v564, %v1081
        %v1083 = vpop.f32.mrf.mxu0
        %v1084 = vadd.f32 %v560, %v1083
        %v1085 = vpop.f32.mrf.mxu0
        %v1086 = vadd.f32 %v564, %v1085
        %1087 = vmatprep.mubr.bf16.mxu0 0
        %1088 = vmatmul.mubr.bf16.gmra.mxu0 %v482
        %v1089 = vpop.f32.mrf.mxu0
        %v1090 = vadd.f32 %v560, %v1089
        %v1091 = vpop.f32.mrf.mxu0
        %v1092 = vadd.f32 %v564, %v1091
        %v1093 = vpop.f32.mrf.mxu0
        %v1094 = vadd.f32 %v560, %v1093
        %v1095 = vpop.f32.mrf.mxu0
        %v1096 = vadd.f32 %v564, %v1095
        %1097 = vdwg.mxu0
        %1098 = vmatprep.subr.bf16.mxu0 %v814
        %1099 = vmatpush1.bf16.msra.mxu0 %v813
        %1100 = vmatprep.subr.bf16.mxu0 %v807
        %1101 = vmatpush1.bf16.msra.mxu0 %v806
        %1102 = vmatprep.subr.bf16.mxu0 %v800
        %1103 = vmatpush1.bf16.msra.mxu0 %v799
        %1104 = vmatprep.subr.bf16.mxu0 %v793
        %1105 = vmatpush1.bf16.msra.mxu0 %v792
        %1106 = vmatprep.subr.bf16.mxu0 %v786
        %1107 = vmatpush1.bf16.msra.mxu0 %v785
        %1108 = vmatprep.subr.bf16.mxu0 %v779
        %1109 = vmatpush1.bf16.msra.mxu0 %v778
        %1110 = vmatprep.subr.bf16.mxu0 %v772
        %1111 = vmatpush1.bf16.msra.mxu0 %v771
        %1112 = vmatprep.subr.bf16.mxu0 %v765
        %1113 = vmatpush1.bf16.msra.mxu0 %v764
        %1114 = vmatprep.subr.bf16.mxu0 0
        %1115 = vmatpush2.bf16.msra.mxu0 0
        %1116 = vmatprep.subr.bf16.mxu0 0
        %1117 = vmatpush2.bf16.msra.mxu0 0
        %1118 = vmatprep.subr.bf16.mxu0 0
        %1119 = vmatpush2.bf16.msra.mxu0 0
        %1120 = vmatprep.subr.bf16.mxu0 0
        %1121 = vmatpush2.bf16.msra.mxu0 0
        %1122 = vmatprep.subr.bf16.mxu0 0
        %1123 = vmatpush2.bf16.msra.mxu0 0
        %1124 = vmatprep.subr.bf16.mxu0 0
        %1125 = vmatpush2.bf16.msra.mxu0 0
        %1126 = vmatprep.subr.bf16.mxu0 0
        %1127 = vmatpush2.bf16.msra.mxu0 0
        %1128 = vmatprep.subr.bf16.mxu0 0
        %1129 = vmatpush2.bf16.msra.mxu0 0
        %1130 = vmatprep.mubr.bf16.mxu0 0
        %1131 = vmatmul.mubr.bf16.gmra.mxu0 %v475
        %v1132 = vpop.f32.mrf.mxu0
        %v1133 = vadd.f32 %v568, %v1132
        %v1134 = vpop.f32.mrf.mxu0
        %v1135 = vadd.f32 %v572, %v1134
        %v1136 = vpop.f32.mrf.mxu0
        %v1137 = vadd.f32 %v568, %v1136
        %v1138 = vpop.f32.mrf.mxu0
        %v1139 = vadd.f32 %v572, %v1138
        %1140 = vmatprep.mubr.bf16.mxu0 0
        %1141 = vmatmul.mubr.bf16.gmra.mxu0 %v476
        %v1142 = vpop.f32.mrf.mxu0
        %v1143 = vadd.f32 %v568, %v1142
        %v1144 = vpop.f32.mrf.mxu0
        %v1145 = vadd.f32 %v572, %v1144
        %v1146 = vpop.f32.mrf.mxu0
        %v1147 = vadd.f32 %v568, %v1146
        %v1148 = vpop.f32.mrf.mxu0
        %v1149 = vadd.f32 %v572, %v1148
        %1150 = vmatprep.mubr.bf16.mxu0 0
        %1151 = vmatmul.mubr.bf16.gmra.mxu0 %v477
        %v1152 = vpop.f32.mrf.mxu0
        %v1153 = vadd.f32 %v568, %v1152
        %v1154 = vpop.f32.mrf.mxu0
        %v1155 = vadd.f32 %v572, %v1154
        %v1156 = vpop.f32.mrf.mxu0
        %v1157 = vadd.f32 %v568, %v1156
        %v1158 = vpop.f32.mrf.mxu0
        %v1159 = vadd.f32 %v572, %v1158
        %1160 = vmatprep.mubr.bf16.mxu0 0
        %1161 = vmatmul.mubr.bf16.gmra.mxu0 %v478
        %v1162 = vpop.f32.mrf.mxu0
        %v1163 = vadd.f32 %v568, %v1162
        %v1164 = vpop.f32.mrf.mxu0
        %v1165 = vadd.f32 %v572, %v1164
        %v1166 = vpop.f32.mrf.mxu0
        %v1167 = vadd.f32 %v568, %v1166
        %v1168 = vpop.f32.mrf.mxu0
        %v1169 = vadd.f32 %v572, %v1168
        %1170 = vmatprep.mubr.bf16.mxu0 0
        %1171 = vmatmul.mubr.bf16.gmra.mxu0 %v479
        %v1172 = vpop.f32.mrf.mxu0
        %v1173 = vadd.f32 %v568, %v1172
        %v1174 = vpop.f32.mrf.mxu0
        %v1175 = vadd.f32 %v572, %v1174
        %v1176 = vpop.f32.mrf.mxu0
        %v1177 = vadd.f32 %v568, %v1176
        %v1178 = vpop.f32.mrf.mxu0
        %v1179 = vadd.f32 %v572, %v1178
        %1180 = vmatprep.mubr.bf16.mxu0 0
        %1181 = vmatmul.mubr.bf16.gmra.mxu0 %v480
        %v1182 = vpop.f32.mrf.mxu0
        %v1183 = vadd.f32 %v568, %v1182
        %v1184 = vpop.f32.mrf.mxu0
        %v1185 = vadd.f32 %v572, %v1184
        %v1186 = vpop.f32.mrf.mxu0
        %v1187 = vadd.f32 %v568, %v1186
        %v1188 = vpop.f32.mrf.mxu0
        %v1189 = vadd.f32 %v572, %v1188
        %1190 = vmatprep.mubr.bf16.mxu0 0
        %1191 = vmatmul.mubr.bf16.gmra.mxu0 %v481
        %v1192 = vpop.f32.mrf.mxu0
        %v1193 = vadd.f32 %v568, %v1192
        %v1194 = vpop.f32.mrf.mxu0
        %v1195 = vadd.f32 %v572, %v1194
        %v1196 = vpop.f32.mrf.mxu0
        %v1197 = vadd.f32 %v568, %v1196
        %v1198 = vpop.f32.mrf.mxu0
        %v1199 = vadd.f32 %v572, %v1198
        %1200 = vmatprep.mubr.bf16.mxu0 0
        %1201 = vmatmul.mubr.bf16.gmra.mxu0 %v482
        %v1202 = vpop.f32.mrf.mxu0
        %v1203 = vadd.f32 %v568, %v1202
        %v1204 = vpop.f32.mrf.mxu0
        %v1205 = vadd.f32 %v572, %v1204
        %v1206 = vpop.f32.mrf.mxu0
        %v1207 = vadd.f32 %v568, %v1206
        %v1208 = vpop.f32.mrf.mxu0
        %v1209 = vadd.f32 %v572, %v1208
        %1210 = vdwg.mxu0
        %1211 = vmatprep.subr.bf16.mxu0 0
        %1212 = vmatpush1.bf16.msra.mxu0 %v815
        %1213 = vmatprep.subr.bf16.mxu0 0
        %1214 = vmatpush1.bf16.msra.mxu0 %v808
        %1215 = vmatprep.subr.bf16.mxu0 0
        %1216 = vmatpush1.bf16.msra.mxu0 %v801
        %1217 = vmatprep.subr.bf16.mxu0 0
        %1218 = vmatpush1.bf16.msra.mxu0 %v794
        %1219 = vmatprep.subr.bf16.mxu0 0
        %1220 = vmatpush1.bf16.msra.mxu0 %v787
        %1221 = vmatprep.subr.bf16.mxu0 0
        %1222 = vmatpush1.bf16.msra.mxu0 %v780
        %1223 = vmatprep.subr.bf16.mxu0 0
        %1224 = vmatpush1.bf16.msra.mxu0 %v773
        %1225 = vmatprep.subr.bf16.mxu0 0
        %1226 = vmatpush1.bf16.msra.mxu0 %v766
        %1227 = vmatprep.subr.bf16.mxu0 0
        %1228 = vmatpush2.bf16.msra.mxu0 0
        %1229 = vmatprep.subr.bf16.mxu0 0
        %1230 = vmatpush2.bf16.msra.mxu0 0
        %1231 = vmatprep.subr.bf16.mxu0 0
        %1232 = vmatpush2.bf16.msra.mxu0 0
        %1233 = vmatprep.subr.bf16.mxu0 0
        %1234 = vmatpush2.bf16.msra.mxu0 0
        %1235 = vmatprep.subr.bf16.mxu0 0
        %1236 = vmatpush2.bf16.msra.mxu0 0
        %1237 = vmatprep.subr.bf16.mxu0 0
        %1238 = vmatpush2.bf16.msra.mxu0 0
        %1239 = vmatprep.subr.bf16.mxu0 0
        %1240 = vmatpush2.bf16.msra.mxu0 0
        %1241 = vmatprep.subr.bf16.mxu0 0
        %1242 = vmatpush2.bf16.msra.mxu0 0
        %1243 = vmatprep.mubr.bf16.mxu0 0
        %1244 = vmatmul.mubr.bf16.gmra.mxu0 %v475
        %v1245 = vpop.f32.mrf.mxu0
        %v1246 = vadd.f32 %v576, %v1245
        %v1247 = vpop.f32.mrf.mxu0
        %v1248 = vpop.f32.mrf.mxu0
        %v1249 = vadd.f32 %v576, %v1248
        %v1250 = vpop.f32.mrf.mxu0
        %1251 = vmatprep.mubr.bf16.mxu0 0
        %1252 = vmatmul.mubr.bf16.gmra.mxu0 %v476
        %v1253 = vpop.f32.mrf.mxu0
        %v1254 = vadd.f32 %v576, %v1253
        %v1255 = vpop.f32.mrf.mxu0
        %v1256 = vpop.f32.mrf.mxu0
        %v1257 = vadd.f32 %v576, %v1256
        %v1258 = vpop.f32.mrf.mxu0
        %1259 = vmatprep.mubr.bf16.mxu0 0
        %1260 = vmatmul.mubr.bf16.gmra.mxu0 %v477
        %v1261 = vpop.f32.mrf.mxu0
        %v1262 = vadd.f32 %v576, %v1261
        %v1263 = vpop.f32.mrf.mxu0
        %v1264 = vpop.f32.mrf.mxu0
        %v1265 = vadd.f32 %v576, %v1264
        %v1266 = vpop.f32.mrf.mxu0
        %1267 = vmatprep.mubr.bf16.mxu0 0
        %1268 = vmatmul.mubr.bf16.gmra.mxu0 %v478
        %v1269 = vpop.f32.mrf.mxu0
        %v1270 = vadd.f32 %v576, %v1269
        %v1271 = vpop.f32.mrf.mxu0
        %v1272 = vpop.f32.mrf.mxu0
        %v1273 = vadd.f32 %v576, %v1272
        %v1274 = vpop.f32.mrf.mxu0
        %1275 = vmatprep.mubr.bf16.mxu0 0
        %1276 = vmatmul.mubr.bf16.gmra.mxu0 %v479
        %v1277 = vpop.f32.mrf.mxu0
        %v1278 = vadd.f32 %v576, %v1277
        %v1279 = vpop.f32.mrf.mxu0
        %v1280 = vpop.f32.mrf.mxu0
        %v1281 = vadd.f32 %v576, %v1280
        %v1282 = vpop.f32.mrf.mxu0
        %1283 = vmatprep.mubr.bf16.mxu0 0
        %1284 = vmatmul.mubr.bf16.gmra.mxu0 %v480
        %v1285 = vpop.f32.mrf.mxu0
        %v1286 = vadd.f32 %v576, %v1285
        %v1287 = vpop.f32.mrf.mxu0
        %v1288 = vpop.f32.mrf.mxu0
        %v1289 = vadd.f32 %v576, %v1288
        %v1290 = vpop.f32.mrf.mxu0
        %1291 = vmatprep.mubr.bf16.mxu0 0
        %1292 = vmatmul.mubr.bf16.gmra.mxu0 %v481
        %v1293 = vpop.f32.mrf.mxu0
        %v1294 = vadd.f32 %v576, %v1293
        %v1295 = vpop.f32.mrf.mxu0
        %v1296 = vpop.f32.mrf.mxu0
        %v1297 = vadd.f32 %v576, %v1296
        %v1298 = vpop.f32.mrf.mxu0
        %1299 = vmatprep.mubr.bf16.mxu0 0
        %1300 = vmatmul.mubr.bf16.gmra.mxu0 %v482
        %v1301 = vpop.f32.mrf.mxu0
        %v1302 = vadd.f32 %v576, %v1301
        %v1303 = vpop.f32.mrf.mxu0
        %v1304 = vpop.f32.mrf.mxu0
        %v1305 = vadd.f32 %v576, %v1304
        %v1306 = vpop.f32.mrf.mxu0
        %1307 = vdwg.mxu0
        %v1308 = vmul.f32 %v907, 0.5
        %v1309 = vmul.f32 %v909, 0.5
        %v1310 = vmul.f32 %v1020, 0.5
        %v1311 = vmul.f32 %v1022, 0.5
        %v1312 = vmul.f32 %v1133, 0.5
        %v1313 = vmul.f32 %v1135, 0.5
        %v1314 = vmul.f32 %v1246, 0.5
        %v1315 = vmul.f32 %v911, 0.5
        %v1316 = vmul.f32 %v913, 0.5
        %v1317 = vmul.f32 %v1024, 0.5
        %v1318 = vmul.f32 %v1026, 0.5
        %v1319 = vmul.f32 %v1137, 0.5
        %v1320 = vmul.f32 %v1139, 0.5
        %v1321 = vmul.f32 %v1249, 0.5
        %v1322 = vmul.f32 %v917, 0.5
        %v1323 = vmul.f32 %v919, 0.5
        %v1324 = vmul.f32 %v1030, 0.5
        %v1325 = vmul.f32 %v1032, 0.5
        %v1326 = vmul.f32 %v1143, 0.5
        %v1327 = vmul.f32 %v1145, 0.5
        %v1328 = vmul.f32 %v1254, 0.5
        %v1329 = vmul.f32 %v921, 0.5
        %v1330 = vmul.f32 %v923, 0.5
        %v1331 = vmul.f32 %v1034, 0.5
        %v1332 = vmul.f32 %v1036, 0.5
        %v1333 = vmul.f32 %v1147, 0.5
        %v1334 = vmul.f32 %v1149, 0.5
        %v1335 = vmul.f32 %v1257, 0.5
        %v1336 = vmul.f32 %v927, 0.5
        %v1337 = vmul.f32 %v929, 0.5
        %v1338 = vmul.f32 %v1040, 0.5
        %v1339 = vmul.f32 %v1042, 0.5
        %v1340 = vmul.f32 %v1153, 0.5
        %v1341 = vmul.f32 %v1155, 0.5
        %v1342 = vmul.f32 %v1262, 0.5
        %v1343 = vmul.f32 %v931, 0.5
        %v1344 = vmul.f32 %v933, 0.5
        %v1345 = vmul.f32 %v1044, 0.5
        %v1346 = vmul.f32 %v1046, 0.5
        %v1347 = vmul.f32 %v1157, 0.5
        %v1348 = vmul.f32 %v1159, 0.5
        %v1349 = vmul.f32 %v1265, 0.5
        %v1350 = vmul.f32 %v937, 0.5
        %v1351 = vmul.f32 %v939, 0.5
        %v1352 = vmul.f32 %v1050, 0.5
        %v1353 = vmul.f32 %v1052, 0.5
        %v1354 = vmul.f32 %v1163, 0.5
        %v1355 = vmul.f32 %v1165, 0.5
        %v1356 = vmul.f32 %v1270, 0.5
        %v1357 = vmul.f32 %v941, 0.5
        %v1358 = vmul.f32 %v943, 0.5
        %v1359 = vmul.f32 %v1054, 0.5
        %v1360 = vmul.f32 %v1056, 0.5
        %v1361 = vmul.f32 %v1167, 0.5
        %v1362 = vmul.f32 %v1169, 0.5
        %v1363 = vmul.f32 %v1273, 0.5
        %v1364 = vmul.f32 %v947, 0.5
        %v1365 = vmul.f32 %v949, 0.5
        %v1366 = vmul.f32 %v1060, 0.5
        %v1367 = vmul.f32 %v1062, 0.5
        %v1368 = vmul.f32 %v1173, 0.5
        %v1369 = vmul.f32 %v1175, 0.5
        %v1370 = vmul.f32 %v1278, 0.5
        %v1371 = vmul.f32 %v951, 0.5
        %v1372 = vmul.f32 %v953, 0.5
        %v1373 = vmul.f32 %v1064, 0.5
        %v1374 = vmul.f32 %v1066, 0.5
        %v1375 = vmul.f32 %v1177, 0.5
        %v1376 = vmul.f32 %v1179, 0.5
        %v1377 = vmul.f32 %v1281, 0.5
        %v1378 = vmul.f32 %v957, 0.5
        %v1379 = vmul.f32 %v959, 0.5
        %v1380 = vmul.f32 %v1070, 0.5
        %v1381 = vmul.f32 %v1072, 0.5
        %v1382 = vmul.f32 %v1183, 0.5
        %v1383 = vmul.f32 %v1185, 0.5
        %v1384 = vmul.f32 %v1286, 0.5
        %v1385 = vmul.f32 %v961, 0.5
        %v1386 = vmul.f32 %v963, 0.5
        %v1387 = vmul.f32 %v1074, 0.5
        %v1388 = vmul.f32 %v1076, 0.5
        %v1389 = vmul.f32 %v1187, 0.5
        %v1390 = vmul.f32 %v1189, 0.5
        %v1391 = vmul.f32 %v1289, 0.5
        %v1392 = vmul.f32 %v967, 0.5
        %v1393 = vmul.f32 %v969, 0.5
        %v1394 = vmul.f32 %v1080, 0.5
        %v1395 = vmul.f32 %v1082, 0.5
        %v1396 = vmul.f32 %v1193, 0.5
        %v1397 = vmul.f32 %v1195, 0.5
        %v1398 = vmul.f32 %v1294, 0.5
        %v1399 = vmul.f32 %v971, 0.5
        %v1400 = vmul.f32 %v973, 0.5
        %v1401 = vmul.f32 %v1084, 0.5
        %v1402 = vmul.f32 %v1086, 0.5
        %v1403 = vmul.f32 %v1197, 0.5
        %v1404 = vmul.f32 %v1199, 0.5
        %v1405 = vmul.f32 %v1297, 0.5
        %v1406 = vmul.f32 %v977, 0.5
        %v1407 = vmul.f32 %v979, 0.5
        %v1408 = vmul.f32 %v1090, 0.5
        %v1409 = vmul.f32 %v1092, 0.5
        %v1410 = vmul.f32 %v1203, 0.5
        %v1411 = vmul.f32 %v1205, 0.5
        %v1412 = vmul.f32 %v1302, 0.5
        %v1413 = vmul.f32 %v981, 0.5
        %v1414 = vmul.f32 %v983, 0.5
        %v1415 = vmul.f32 %v1094, 0.5
        %v1416 = vmul.f32 %v1096, 0.5
        %v1417 = vmul.f32 %v1207, 0.5
        %v1418 = vmul.f32 %v1209, 0.5
        %v1419 = vmul.f32 %v1305, 0.5
        %v1420 = vtanh.pop %v1308
        %v1421 = vtanh.pop %v1309
        %v1422 = vtanh.pop %v1310
        %v1423 = vtanh.pop %v1311
        %v1424 = vtanh.pop %v1312
        %v1425 = vtanh.pop %v1313
        %v1426 = vtanh.pop %v1314
        %v1427 = vtanh.pop %v1315
        %v1428 = vtanh.pop %v1316
        %v1429 = vtanh.pop %v1317
        %v1430 = vtanh.pop %v1318
        %v1431 = vtanh.pop %v1319
        %v1432 = vtanh.pop %v1320
        %v1433 = vtanh.pop %v1321
        %v1434 = vtanh.pop %v1322
        %v1435 = vtanh.pop %v1323
        %v1436 = vtanh.pop %v1324
        %v1437 = vtanh.pop %v1325
        %v1438 = vtanh.pop %v1326
        %v1439 = vtanh.pop %v1327
        %v1440 = vtanh.pop %v1328
        %v1441 = vtanh.pop %v1329
        %v1442 = vtanh.pop %v1330
        %v1443 = vtanh.pop %v1331
        %v1444 = vtanh.pop %v1332
        %v1445 = vtanh.pop %v1333
        %v1446 = vtanh.pop %v1334
        %v1447 = vtanh.pop %v1335
        %v1448 = vtanh.pop %v1336
        %v1449 = vtanh.pop %v1337
        %v1450 = vtanh.pop %v1338
        %v1451 = vtanh.pop %v1339
        %v1452 = vtanh.pop %v1340
        %v1453 = vtanh.pop %v1341
        %v1454 = vtanh.pop %v1342
        %v1455 = vtanh.pop %v1343
        %v1456 = vtanh.pop %v1344
        %v1457 = vtanh.pop %v1345
        %v1458 = vtanh.pop %v1346
        %v1459 = vtanh.pop %v1347
        %v1460 = vtanh.pop %v1348
        %v1461 = vtanh.pop %v1349
        %v1462 = vtanh.pop %v1350
        %v1463 = vtanh.pop %v1351
        %v1464 = vtanh.pop %v1352
        %v1465 = vtanh.pop %v1353
        %v1466 = vtanh.pop %v1354
        %v1467 = vtanh.pop %v1355
        %v1468 = vtanh.pop %v1356
        %v1469 = vtanh.pop %v1357
        %v1470 = vtanh.pop %v1358
        %v1471 = vtanh.pop %v1359
        %v1472 = vtanh.pop %v1360
        %v1473 = vtanh.pop %v1361
        %v1474 = vtanh.pop %v1362
        %v1475 = vtanh.pop %v1363
        %v1476 = vtanh.pop %v1364
        %v1477 = vtanh.pop %v1365
        %v1478 = vtanh.pop %v1366
        %v1479 = vtanh.pop %v1367
        %v1480 = vtanh.pop %v1368
        %v1481 = vtanh.pop %v1369
        %v1482 = vtanh.pop %v1370
        %v1483 = vtanh.pop %v1371
        %v1484 = vtanh.pop %v1372
        %v1485 = vtanh.pop %v1373
        %v1486 = vtanh.pop %v1374
        %v1487 = vtanh.pop %v1375
        %v1488 = vtanh.pop %v1376
        %v1489 = vtanh.pop %v1377
        %v1490 = vtanh.pop %v1378
        %v1491 = vtanh.pop %v1379
        %v1492 = vtanh.pop %v1380
        %v1493 = vtanh.pop %v1381
        %v1494 = vtanh.pop %v1382
        %v1495 = vtanh.pop %v1383
        %v1496 = vtanh.pop %v1384
        %v1497 = vtanh.pop %v1385
        %v1498 = vtanh.pop %v1386
        %v1499 = vtanh.pop %v1387
        %v1500 = vtanh.pop %v1388
        %v1501 = vtanh.pop %v1389
        %v1502 = vtanh.pop %v1390
        %v1503 = vtanh.pop %v1391
        %v1504 = vtanh.pop %v1392
        %v1505 = vtanh.pop %v1393
        %v1506 = vtanh.pop %v1394
        %v1507 = vtanh.pop %v1395
        %v1508 = vtanh.pop %v1396
        %v1509 = vtanh.pop %v1397
        %v1510 = vtanh.pop %v1398
        %v1511 = vtanh.pop %v1399
        %v1512 = vtanh.pop %v1400
        %v1513 = vtanh.pop %v1401
        %v1514 = vtanh.pop %v1402
        %v1515 = vtanh.pop %v1403
        %v1516 = vtanh.pop %v1404
        %v1517 = vtanh.pop %v1405
        %v1518 = vtanh.pop %v1406
        %v1519 = vtanh.pop %v1407
        %v1520 = vtanh.pop %v1408
        %v1521 = vtanh.pop %v1409
        %v1522 = vtanh.pop %v1410
        %v1523 = vtanh.pop %v1411
        %v1524 = vtanh.pop %v1412
        %v1525 = vtanh.pop %v1413
        %v1526 = vtanh.pop %v1414
        %v1527 = vtanh.pop %v1415
        %v1528 = vtanh.pop %v1416
        %v1529 = vtanh.pop %v1417
        %v1530 = vtanh.pop %v1418
        %v1531 = vtanh.pop %v1419
        %v1532 = vmul.f32 %v1420, 0.5
        %v1533 = vmul.f32 %v1421, 0.5
        %v1534 = vmul.f32 %v1422, 0.5
        %v1535 = vmul.f32 %v1423, 0.5
        %v1536 = vmul.f32 %v1424, 0.5
        %v1537 = vmul.f32 %v1425, 0.5
        %v1538 = vmul.f32 %v1426, 0.5
        %v1539 = vmul.f32 %v1427, 0.5
        %v1540 = vmul.f32 %v1428, 0.5
        %v1541 = vmul.f32 %v1429, 0.5
        %v1542 = vmul.f32 %v1430, 0.5
        %v1543 = vmul.f32 %v1431, 0.5
        %v1544 = vmul.f32 %v1432, 0.5
        %v1545 = vmul.f32 %v1433, 0.5
        %v1546 = vmul.f32 %v1434, 0.5
        %v1547 = vmul.f32 %v1435, 0.5
        %v1548 = vmul.f32 %v1436, 0.5
        %v1549 = vmul.f32 %v1437, 0.5
        %v1550 = vmul.f32 %v1438, 0.5
        %v1551 = vmul.f32 %v1439, 0.5
        %v1552 = vmul.f32 %v1440, 0.5
        %v1553 = vmul.f32 %v1441, 0.5
        %v1554 = vmul.f32 %v1442, 0.5
        %v1555 = vmul.f32 %v1443, 0.5
        %v1556 = vmul.f32 %v1444, 0.5
        %v1557 = vmul.f32 %v1445, 0.5
        %v1558 = vmul.f32 %v1446, 0.5
        %v1559 = vmul.f32 %v1447, 0.5
        %v1560 = vmul.f32 %v1448, 0.5
        %v1561 = vmul.f32 %v1449, 0.5
        %v1562 = vmul.f32 %v1450, 0.5
        %v1563 = vmul.f32 %v1451, 0.5
        %v1564 = vmul.f32 %v1452, 0.5
        %v1565 = vmul.f32 %v1453, 0.5
        %v1566 = vmul.f32 %v1454, 0.5
        %v1567 = vmul.f32 %v1455, 0.5
        %v1568 = vmul.f32 %v1456, 0.5
        %v1569 = vmul.f32 %v1457, 0.5
        %v1570 = vmul.f32 %v1458, 0.5
        %v1571 = vmul.f32 %v1459, 0.5
        %v1572 = vmul.f32 %v1460, 0.5
        %v1573 = vmul.f32 %v1461, 0.5
        %v1574 = vmul.f32 %v1462, 0.5
        %v1575 = vmul.f32 %v1463, 0.5
        %v1576 = vmul.f32 %v1464, 0.5
        %v1577 = vmul.f32 %v1465, 0.5
        %v1578 = vmul.f32 %v1466, 0.5
        %v1579 = vmul.f32 %v1467, 0.5
        %v1580 = vmul.f32 %v1468, 0.5
        %v1581 = vmul.f32 %v1469, 0.5
        %v1582 = vmul.f32 %v1470, 0.5
        %v1583 = vmul.f32 %v1471, 0.5
        %v1584 = vmul.f32 %v1472, 0.5
        %v1585 = vmul.f32 %v1473, 0.5
        %v1586 = vmul.f32 %v1474, 0.5
        %v1587 = vmul.f32 %v1475, 0.5
        %v1588 = vmul.f32 %v1476, 0.5
        %v1589 = vmul.f32 %v1477, 0.5
        %v1590 = vmul.f32 %v1478, 0.5
        %v1591 = vmul.f32 %v1479, 0.5
        %v1592 = vmul.f32 %v1480, 0.5
        %v1593 = vmul.f32 %v1481, 0.5
        %v1594 = vmul.f32 %v1482, 0.5
        %v1595 = vmul.f32 %v1483, 0.5
        %v1596 = vmul.f32 %v1484, 0.5
        %v1597 = vmul.f32 %v1485, 0.5
        %v1598 = vmul.f32 %v1486, 0.5
        %v1599 = vmul.f32 %v1487, 0.5
        %v1600 = vmul.f32 %v1488, 0.5
        %v1601 = vmul.f32 %v1489, 0.5
        %v1602 = vmul.f32 %v1490, 0.5
        %v1603 = vmul.f32 %v1491, 0.5
        %v1604 = vmul.f32 %v1492, 0.5
        %v1605 = vmul.f32 %v1493, 0.5
        %v1606 = vmul.f32 %v1494, 0.5
        %v1607 = vmul.f32 %v1495, 0.5
        %v1608 = vmul.f32 %v1496, 0.5
        %v1609 = vmul.f32 %v1497, 0.5
        %v1610 = vmul.f32 %v1498, 0.5
        %v1611 = vmul.f32 %v1499, 0.5
        %v1612 = vmul.f32 %v1500, 0.5
        %v1613 = vmul.f32 %v1501, 0.5
        %v1614 = vmul.f32 %v1502, 0.5
        %v1615 = vmul.f32 %v1503, 0.5
        %v1616 = vmul.f32 %v1504, 0.5
        %v1617 = vmul.f32 %v1505, 0.5
        %v1618 = vmul.f32 %v1506, 0.5
        %v1619 = vmul.f32 %v1507, 0.5
        %v1620 = vmul.f32 %v1508, 0.5
        %v1621 = vmul.f32 %v1509, 0.5
        %v1622 = vmul.f32 %v1510, 0.5
        %v1623 = vmul.f32 %v1511, 0.5
        %v1624 = vmul.f32 %v1512, 0.5
        %v1625 = vmul.f32 %v1513, 0.5
        %v1626 = vmul.f32 %v1514, 0.5
        %v1627 = vmul.f32 %v1515, 0.5
        %v1628 = vmul.f32 %v1516, 0.5
        %v1629 = vmul.f32 %v1517, 0.5
        %v1630 = vmul.f32 %v1518, 0.5
        %v1631 = vmul.f32 %v1519, 0.5
        %v1632 = vmul.f32 %v1520, 0.5
        %v1633 = vmul.f32 %v1521, 0.5
        %v1634 = vmul.f32 %v1522, 0.5
        %v1635 = vmul.f32 %v1523, 0.5
        %v1636 = vmul.f32 %v1524, 0.5
        %v1637 = vmul.f32 %v1525, 0.5
        %v1638 = vmul.f32 %v1526, 0.5
        %v1639 = vmul.f32 %v1527, 0.5
        %v1640 = vmul.f32 %v1528, 0.5
        %v1641 = vmul.f32 %v1529, 0.5
        %v1642 = vmul.f32 %v1530, 0.5
        %v1643 = vmul.f32 %v1531, 0.5
        %v1644 = vadd.f32 %v1532, 0.5
        %v1645 = vadd.f32 %v1533, 0.5
        %v1646 = vadd.f32 %v1534, 0.5
        %v1647 = vadd.f32 %v1535, 0.5
        %v1648 = vadd.f32 %v1536, 0.5
        %v1649 = vadd.f32 %v1537, 0.5
        %v1650 = vadd.f32 %v1538, 0.5
        %v1651 = vadd.f32 %v1539, 0.5
        %v1652 = vadd.f32 %v1540, 0.5
        %v1653 = vadd.f32 %v1541, 0.5
        %v1654 = vadd.f32 %v1542, 0.5
        %v1655 = vadd.f32 %v1543, 0.5
        %v1656 = vadd.f32 %v1544, 0.5
        %v1657 = vadd.f32 %v1545, 0.5
        %v1658 = vadd.f32 %v1546, 0.5
        %v1659 = vadd.f32 %v1547, 0.5
        %v1660 = vadd.f32 %v1548, 0.5
        %v1661 = vadd.f32 %v1549, 0.5
        %v1662 = vadd.f32 %v1550, 0.5
        %v1663 = vadd.f32 %v1551, 0.5
        %v1664 = vadd.f32 %v1552, 0.5
        %v1665 = vadd.f32 %v1553, 0.5
        %v1666 = vadd.f32 %v1554, 0.5
        %v1667 = vadd.f32 %v1555, 0.5
        %v1668 = vadd.f32 %v1556, 0.5
        %v1669 = vadd.f32 %v1557, 0.5
        %v1670 = vadd.f32 %v1558, 0.5
        %v1671 = vadd.f32 %v1559, 0.5
        %v1672 = vadd.f32 %v1560, 0.5
        %v1673 = vadd.f32 %v1561, 0.5
        %v1674 = vadd.f32 %v1562, 0.5
        %v1675 = vadd.f32 %v1563, 0.5
        %v1676 = vadd.f32 %v1564, 0.5
        %v1677 = vadd.f32 %v1565, 0.5
        %v1678 = vadd.f32 %v1566, 0.5
        %v1679 = vadd.f32 %v1567, 0.5
        %v1680 = vadd.f32 %v1568, 0.5
        %v1681 = vadd.f32 %v1569, 0.5
        %v1682 = vadd.f32 %v1570, 0.5
        %v1683 = vadd.f32 %v1571, 0.5
        %v1684 = vadd.f32 %v1572, 0.5
        %v1685 = vadd.f32 %v1573, 0.5
        %v1686 = vadd.f32 %v1574, 0.5
        %v1687 = vadd.f32 %v1575, 0.5
        %v1688 = vadd.f32 %v1576, 0.5
        %v1689 = vadd.f32 %v1577, 0.5
        %v1690 = vadd.f32 %v1578, 0.5
        %v1691 = vadd.f32 %v1579, 0.5
        %v1692 = vadd.f32 %v1580, 0.5
        %v1693 = vadd.f32 %v1581, 0.5
        %v1694 = vadd.f32 %v1582, 0.5
        %v1695 = vadd.f32 %v1583, 0.5
        %v1696 = vadd.f32 %v1584, 0.5
        %v1697 = vadd.f32 %v1585, 0.5
        %v1698 = vadd.f32 %v1586, 0.5
        %v1699 = vadd.f32 %v1587, 0.5
        %v1700 = vadd.f32 %v1588, 0.5
        %v1701 = vadd.f32 %v1589, 0.5
        %v1702 = vadd.f32 %v1590, 0.5
        %v1703 = vadd.f32 %v1591, 0.5
        %v1704 = vadd.f32 %v1592, 0.5
        %v1705 = vadd.f32 %v1593, 0.5
        %v1706 = vadd.f32 %v1594, 0.5
        %v1707 = vadd.f32 %v1595, 0.5
        %v1708 = vadd.f32 %v1596, 0.5
        %v1709 = vadd.f32 %v1597, 0.5
        %v1710 = vadd.f32 %v1598, 0.5
        %v1711 = vadd.f32 %v1599, 0.5
        %v1712 = vadd.f32 %v1600, 0.5
        %v1713 = vadd.f32 %v1601, 0.5
        %v1714 = vadd.f32 %v1602, 0.5
        %v1715 = vadd.f32 %v1603, 0.5
        %v1716 = vadd.f32 %v1604, 0.5
        %v1717 = vadd.f32 %v1605, 0.5
        %v1718 = vadd.f32 %v1606, 0.5
        %v1719 = vadd.f32 %v1607, 0.5
        %v1720 = vadd.f32 %v1608, 0.5
        %v1721 = vadd.f32 %v1609, 0.5
        %v1722 = vadd.f32 %v1610, 0.5
        %v1723 = vadd.f32 %v1611, 0.5
        %v1724 = vadd.f32 %v1612, 0.5
        %v1725 = vadd.f32 %v1613, 0.5
        %v1726 = vadd.f32 %v1614, 0.5
        %v1727 = vadd.f32 %v1615, 0.5
        %v1728 = vadd.f32 %v1616, 0.5
        %v1729 = vadd.f32 %v1617, 0.5
        %v1730 = vadd.f32 %v1618, 0.5
        %v1731 = vadd.f32 %v1619, 0.5
        %v1732 = vadd.f32 %v1620, 0.5
        %v1733 = vadd.f32 %v1621, 0.5
        %v1734 = vadd.f32 %v1622, 0.5
        %v1735 = vadd.f32 %v1623, 0.5
        %v1736 = vadd.f32 %v1624, 0.5
        %v1737 = vadd.f32 %v1625, 0.5
        %v1738 = vadd.f32 %v1626, 0.5
        %v1739 = vadd.f32 %v1627, 0.5
        %v1740 = vadd.f32 %v1628, 0.5
        %v1741 = vadd.f32 %v1629, 0.5
        %v1742 = vadd.f32 %v1630, 0.5
        %v1743 = vadd.f32 %v1631, 0.5
        %v1744 = vadd.f32 %v1632, 0.5
        %v1745 = vadd.f32 %v1633, 0.5
        %v1746 = vadd.f32 %v1634, 0.5
        %v1747 = vadd.f32 %v1635, 0.5
        %v1748 = vadd.f32 %v1636, 0.5
        %v1749 = vadd.f32 %v1637, 0.5
        %v1750 = vadd.f32 %v1638, 0.5
        %v1751 = vadd.f32 %v1639, 0.5
        %v1752 = vadd.f32 %v1640, 0.5
        %v1753 = vadd.f32 %v1641, 0.5
        %v1754 = vadd.f32 %v1642, 0.5
        %v1755 = vadd.f32 %v1643, 0.5
        %v1756 = vpack.c.bf16 %v1651, %v1644
        %v1757 = vpack.c.bf16 %v1652, %v1645
        %v1758 = vpack.c.bf16 %v1653, %v1646
        %v1759 = vpack.c.bf16 %v1654, %v1647
        %v1760 = vpack.c.bf16 %v1655, %v1648
        %v1761 = vpack.c.bf16 %v1656, %v1649
        %v1762 = vpack.c.bf16 %v1657, %v1650
        %v1763 = vpack.c.bf16 %v1665, %v1658
        %v1764 = vpack.c.bf16 %v1666, %v1659
        %v1765 = vpack.c.bf16 %v1667, %v1660
        %v1766 = vpack.c.bf16 %v1668, %v1661
        %v1767 = vpack.c.bf16 %v1669, %v1662
        %v1768 = vpack.c.bf16 %v1670, %v1663
        %v1769 = vpack.c.bf16 %v1671, %v1664
        %v1770 = vpack.c.bf16 %v1679, %v1672
        %v1771 = vpack.c.bf16 %v1680, %v1673
        %v1772 = vpack.c.bf16 %v1681, %v1674
        %v1773 = vpack.c.bf16 %v1682, %v1675
        %v1774 = vpack.c.bf16 %v1683, %v1676
        %v1775 = vpack.c.bf16 %v1684, %v1677
        %v1776 = vpack.c.bf16 %v1685, %v1678
        %v1777 = vpack.c.bf16 %v1693, %v1686
        %v1778 = vpack.c.bf16 %v1694, %v1687
        %v1779 = vpack.c.bf16 %v1695, %v1688
        %v1780 = vpack.c.bf16 %v1696, %v1689
        %v1781 = vpack.c.bf16 %v1697, %v1690
        %v1782 = vpack.c.bf16 %v1698, %v1691
        %v1783 = vpack.c.bf16 %v1699, %v1692
        %v1784 = vpack.c.bf16 %v1707, %v1700
        %v1785 = vpack.c.bf16 %v1708, %v1701
        %v1786 = vpack.c.bf16 %v1709, %v1702
        %v1787 = vpack.c.bf16 %v1710, %v1703
        %v1788 = vpack.c.bf16 %v1711, %v1704
        %v1789 = vpack.c.bf16 %v1712, %v1705
        %v1790 = vpack.c.bf16 %v1713, %v1706
        %v1791 = vpack.c.bf16 %v1721, %v1714
        %v1792 = vpack.c.bf16 %v1722, %v1715
        %v1793 = vpack.c.bf16 %v1723, %v1716
        %v1794 = vpack.c.bf16 %v1724, %v1717
        %v1795 = vpack.c.bf16 %v1725, %v1718
        %v1796 = vpack.c.bf16 %v1726, %v1719
        %v1797 = vpack.c.bf16 %v1727, %v1720
        %v1798 = vpack.c.bf16 %v1735, %v1728
        %v1799 = vpack.c.bf16 %v1736, %v1729
        %v1800 = vpack.c.bf16 %v1737, %v1730
        %v1801 = vpack.c.bf16 %v1738, %v1731
        %v1802 = vpack.c.bf16 %v1739, %v1732
        %v1803 = vpack.c.bf16 %v1740, %v1733
        %v1804 = vpack.c.bf16 %v1741, %v1734
        %v1805 = vpack.c.bf16 %v1749, %v1742
        %v1806 = vpack.c.bf16 %v1750, %v1743
        %v1807 = vpack.c.bf16 %v1751, %v1744
        %v1808 = vpack.c.bf16 %v1752, %v1745
        %v1809 = vpack.c.bf16 %v1753, %v1746
        %v1810 = vpack.c.bf16 %v1754, %v1747
        %v1811 = vpack.c.bf16 %v1755, %v1748
        %v1868 = vunpack.c.l.b16 %v1756
        %v1869 = vunpack.c.l.b16 %v1757
        %v1870 = vunpack.c.l.b16 %v1758
        %v1871 = vunpack.c.l.b16 %v1759
        %v1872 = vunpack.c.l.b16 %v1760
        %v1873 = vunpack.c.l.b16 %v1761
        %v1874 = vunpack.c.l.b16 %v1762
        %v1875 = vunpack.c.h.b16 %v1756
        %v1876 = vunpack.c.h.b16 %v1757
        %v1877 = vunpack.c.h.b16 %v1758
        %v1878 = vunpack.c.h.b16 %v1759
        %v1879 = vunpack.c.h.b16 %v1760
        %v1880 = vunpack.c.h.b16 %v1761
        %v1881 = vunpack.c.h.b16 %v1762
        %v1882 = vunpack.c.l.b16 %v1763
        %v1883 = vunpack.c.l.b16 %v1764
        %v1884 = vunpack.c.l.b16 %v1765
        %v1885 = vunpack.c.l.b16 %v1766
        %v1886 = vunpack.c.l.b16 %v1767
        %v1887 = vunpack.c.l.b16 %v1768
        %v1888 = vunpack.c.l.b16 %v1769
        %v1889 = vunpack.c.h.b16 %v1763
        %v1890 = vunpack.c.h.b16 %v1764
        %v1891 = vunpack.c.h.b16 %v1765
        %v1892 = vunpack.c.h.b16 %v1766
        %v1893 = vunpack.c.h.b16 %v1767
        %v1894 = vunpack.c.h.b16 %v1768
        %v1895 = vunpack.c.h.b16 %v1769
        %v1896 = vunpack.c.l.b16 %v1770
        %v1897 = vunpack.c.l.b16 %v1771
        %v1898 = vunpack.c.l.b16 %v1772
        %v1899 = vunpack.c.l.b16 %v1773
        %v1900 = vunpack.c.l.b16 %v1774
        %v1901 = vunpack.c.l.b16 %v1775
        %v1902 = vunpack.c.l.b16 %v1776
        %v1903 = vunpack.c.h.b16 %v1770
        %v1904 = vunpack.c.h.b16 %v1771
        %v1905 = vunpack.c.h.b16 %v1772
        %v1906 = vunpack.c.h.b16 %v1773
        %v1907 = vunpack.c.h.b16 %v1774
        %v1908 = vunpack.c.h.b16 %v1775
        %v1909 = vunpack.c.h.b16 %v1776
        %v1910 = vunpack.c.l.b16 %v1777
        %v1911 = vunpack.c.l.b16 %v1778
        %v1912 = vunpack.c.l.b16 %v1779
        %v1913 = vunpack.c.l.b16 %v1780
        %v1914 = vunpack.c.l.b16 %v1781
        %v1915 = vunpack.c.l.b16 %v1782
        %v1916 = vunpack.c.l.b16 %v1783
        %v1917 = vunpack.c.h.b16 %v1777
        %v1918 = vunpack.c.h.b16 %v1778
        %v1919 = vunpack.c.h.b16 %v1779
        %v1920 = vunpack.c.h.b16 %v1780
        %v1921 = vunpack.c.h.b16 %v1781
        %v1922 = vunpack.c.h.b16 %v1782
        %v1923 = vunpack.c.h.b16 %v1783
        %v1924 = vunpack.c.l.b16 %v1784
        %v1925 = vunpack.c.l.b16 %v1785
        %v1926 = vunpack.c.l.b16 %v1786
        %v1927 = vunpack.c.l.b16 %v1787
        %v1928 = vunpack.c.l.b16 %v1788
        %v1929 = vunpack.c.l.b16 %v1789
        %v1930 = vunpack.c.l.b16 %v1790
        %v1931 = vunpack.c.h.b16 %v1784
        %v1932 = vunpack.c.h.b16 %v1785
        %v1933 = vunpack.c.h.b16 %v1786
        %v1934 = vunpack.c.h.b16 %v1787
        %v1935 = vunpack.c.h.b16 %v1788
        %v1936 = vunpack.c.h.b16 %v1789
        %v1937 = vunpack.c.h.b16 %v1790
        %v1938 = vunpack.c.l.b16 %v1791
        %v1939 = vunpack.c.l.b16 %v1792
        %v1940 = vunpack.c.l.b16 %v1793
        %v1941 = vunpack.c.l.b16 %v1794
        %v1942 = vunpack.c.l.b16 %v1795
        %v1943 = vunpack.c.l.b16 %v1796
        %v1944 = vunpack.c.l.b16 %v1797
        %v1945 = vunpack.c.h.b16 %v1791
        %v1946 = vunpack.c.h.b16 %v1792
        %v1947 = vunpack.c.h.b16 %v1793
        %v1948 = vunpack.c.h.b16 %v1794
        %v1949 = vunpack.c.h.b16 %v1795
        %v1950 = vunpack.c.h.b16 %v1796
        %v1951 = vunpack.c.h.b16 %v1797
        %v1952 = vunpack.c.l.b16 %v1798
        %v1953 = vunpack.c.l.b16 %v1799
        %v1954 = vunpack.c.l.b16 %v1800
        %v1955 = vunpack.c.l.b16 %v1801
        %v1956 = vunpack.c.l.b16 %v1802
        %v1957 = vunpack.c.l.b16 %v1803
        %v1958 = vunpack.c.l.b16 %v1804
        %v1959 = vunpack.c.h.b16 %v1798
        %v1960 = vunpack.c.h.b16 %v1799
        %v1961 = vunpack.c.h.b16 %v1800
        %v1962 = vunpack.c.h.b16 %v1801
        %v1963 = vunpack.c.h.b16 %v1802
        %v1964 = vunpack.c.h.b16 %v1803
        %v1965 = vunpack.c.h.b16 %v1804
        %v1966 = vunpack.c.l.b16 %v1805
        %v1967 = vunpack.c.l.b16 %v1806
        %v1968 = vunpack.c.l.b16 %v1807
        %v1969 = vunpack.c.l.b16 %v1808
        %v1970 = vunpack.c.l.b16 %v1809
        %v1971 = vunpack.c.l.b16 %v1810
        %v1972 = vunpack.c.l.b16 %v1811
        %v1973 = vunpack.c.h.b16 %v1805
        %v1974 = vunpack.c.h.b16 %v1806
        %v1975 = vunpack.c.h.b16 %v1807
        %v1976 = vunpack.c.h.b16 %v1808
        %v1977 = vunpack.c.h.b16 %v1809
        %v1978 = vunpack.c.h.b16 %v1810
        %v1979 = vunpack.c.h.b16 %v1811
        %v1980 = vpack.c.b16 %v1869, %v1868
        %v1981 = vpack.c.b16 %v1871, %v1870
        %v1982 = vpack.c.b16 %v1873, %v1872
        %v1983 = vpack.c.b16 %v1874, %v1874
        %v1984 = vpack.c.b16 %v1876, %v1875
        %v1985 = vpack.c.b16 %v1878, %v1877
        %v1986 = vpack.c.b16 %v1880, %v1879
        %v1987 = vpack.c.b16 %v1881, %v1881
        %v1988 = vpack.c.b16 %v1883, %v1882
        %v1989 = vpack.c.b16 %v1885, %v1884
        %v1990 = vpack.c.b16 %v1887, %v1886
        %v1991 = vpack.c.b16 %v1888, %v1888
        %v1992 = vpack.c.b16 %v1890, %v1889
        %v1993 = vpack.c.b16 %v1892, %v1891
        %v1994 = vpack.c.b16 %v1894, %v1893
        %v1995 = vpack.c.b16 %v1895, %v1895
        %v1996 = vpack.c.b16 %v1897, %v1896
        %v1997 = vpack.c.b16 %v1899, %v1898
        %v1998 = vpack.c.b16 %v1901, %v1900
        %v1999 = vpack.c.b16 %v1902, %v1902
        %v2000 = vpack.c.b16 %v1904, %v1903
        %v2001 = vpack.c.b16 %v1906, %v1905
        %v2002 = vpack.c.b16 %v1908, %v1907
        %v2003 = vpack.c.b16 %v1909, %v1909
        %v2004 = vpack.c.b16 %v1911, %v1910
        %v2005 = vpack.c.b16 %v1913, %v1912
        %v2006 = vpack.c.b16 %v1915, %v1914
        %v2007 = vpack.c.b16 %v1916, %v1916
        %v2008 = vpack.c.b16 %v1918, %v1917
        %v2009 = vpack.c.b16 %v1920, %v1919
        %v2010 = vpack.c.b16 %v1922, %v1921
        %v2011 = vpack.c.b16 %v1923, %v1923
        %v2012 = vpack.c.b16 %v1925, %v1924
        %v2013 = vpack.c.b16 %v1927, %v1926
        %v2014 = vpack.c.b16 %v1929, %v1928
        %v2015 = vpack.c.b16 %v1930, %v1930
        %v2016 = vpack.c.b16 %v1932, %v1931
        %v2017 = vpack.c.b16 %v1934, %v1933
        %v2018 = vpack.c.b16 %v1936, %v1935
        %v2019 = vpack.c.b16 %v1937, %v1937
        %v2020 = vpack.c.b16 %v1939, %v1938
        %v2021 = vpack.c.b16 %v1941, %v1940
        %v2022 = vpack.c.b16 %v1943, %v1942
        %v2023 = vpack.c.b16 %v1944, %v1944
        %v2024 = vpack.c.b16 %v1946, %v1945
        %v2025 = vpack.c.b16 %v1948, %v1947
        %v2026 = vpack.c.b16 %v1950, %v1949
        %v2027 = vpack.c.b16 %v1951, %v1951
        %v2028 = vpack.c.b16 %v1953, %v1952
        %v2029 = vpack.c.b16 %v1955, %v1954
        %v2030 = vpack.c.b16 %v1957, %v1956
        %v2031 = vpack.c.b16 %v1958, %v1958
        %v2032 = vpack.c.b16 %v1960, %v1959
        %v2033 = vpack.c.b16 %v1962, %v1961
        %v2034 = vpack.c.b16 %v1964, %v1963
        %v2035 = vpack.c.b16 %v1965, %v1965
        %v2036 = vpack.c.b16 %v1967, %v1966
        %v2037 = vpack.c.b16 %v1969, %v1968
        %v2038 = vpack.c.b16 %v1971, %v1970
        %v2039 = vpack.c.b16 %v1972, %v1972
        %v2040 = vpack.c.b16 %v1974, %v1973
        %v2041 = vpack.c.b16 %v1976, %v1975
        %v2042 = vpack.c.b16 %v1978, %v1977
        %v2043 = vpack.c.b16 %v1979, %v1979
        %2108 = vst [vmem:[%s233] sm:$0xff] %v1980
        %2109 = vst [vmem:[%s233 + $0x8] sm:$0xff] %v1981
        %2110 = vst [vmem:[%s233 + $0x10] sm:$0xff] %v1982
        %2111 = vst [vmem:[%s233 + $0x18] sm:$0xf] %v1983
        %2112 = vst [vmem:[%s233 + $0x1c] sm:$0xff] %v1984
        %2113 = vst [vmem:[%s233 + $0x24] sm:$0xff] %v1985
        %2114 = vst [vmem:[%s233 + $0x2c] sm:$0xff] %v1986
        %2115 = vst [vmem:[%s233 + $0x34] sm:$0xf] %v1987
        %2116 = vst [vmem:[%s233 + $0x38] sm:$0xff] %v1988
        %2117 = vst [vmem:[%s233 + $0x40] sm:$0xff] %v1989
        %2118 = vst [vmem:[%s233 + $0x48] sm:$0xff] %v1990
        %2119 = vst [vmem:[%s233 + $0x50] sm:$0xf] %v1991
        %2120 = vst [vmem:[%s233 + $0x54] sm:$0xff] %v1992
        %2121 = vst [vmem:[%s233 + $0x5c] sm:$0xff] %v1993
        %2122 = vst [vmem:[%s233 + $0x64] sm:$0xff] %v1994
        %2123 = vst [vmem:[%s233 + $0x6c] sm:$0xf] %v1995
        %2124 = vst [vmem:[%s233 + $0x70] sm:$0xff] %v1996
        %2125 = vst [vmem:[%s233 + $0x78] sm:$0xff] %v1997
        %2126 = vst [vmem:[%s233 + $0x80] sm:$0xff] %v1998
        %2127 = vst [vmem:[%s233 + $0x88] sm:$0xf] %v1999
        %2128 = vst [vmem:[%s233 + $0x8c] sm:$0xff] %v2000
        %2129 = vst [vmem:[%s233 + $0x94] sm:$0xff] %v2001
        %2130 = vst [vmem:[%s233 + $0x9c] sm:$0xff] %v2002
        %2131 = vst [vmem:[%s233 + $0xa4] sm:$0xf] %v2003
        %2132 = vst [vmem:[%s233 + $0xa8] sm:$0xff] %v2004
        %2133 = vst [vmem:[%s233 + $0xb0] sm:$0xff] %v2005
        %2134 = vst [vmem:[%s233 + $0xb8] sm:$0xff] %v2006
        %2135 = vst [vmem:[%s233 + $0xc0] sm:$0xf] %v2007
        %2136 = vst [vmem:[%s233 + $0xc4] sm:$0xff] %v2008
        %2137 = vst [vmem:[%s233 + $0xcc] sm:$0xff] %v2009
        %2138 = vst [vmem:[%s233 + $0xd4] sm:$0xff] %v2010
        %2139 = vst [vmem:[%s233 + $0xdc] sm:$0xf] %v2011
        %2140 = vst [vmem:[%s233 + $0xe0] sm:$0xff] %v2012
        %2141 = vst [vmem:[%s233 + $0xe8] sm:$0xff] %v2013
        %2142 = vst [vmem:[%s233 + $0xf0] sm:$0xff] %v2014
        %2143 = vst [vmem:[%s233 + $0xf8] sm:$0xf] %v2015
        %2144 = vst [vmem:[%s233 + $0xfc] sm:$0xff] %v2016
        %2145 = vst [vmem:[%s233 + $0x104] sm:$0xff] %v2017
        %2146 = vst [vmem:[%s233 + $0x10c] sm:$0xff] %v2018
        %2147 = vst [vmem:[%s233 + $0x114] sm:$0xf] %v2019
        %2148 = vst [vmem:[%s233 + $0x118] sm:$0xff] %v2020
        %2149 = vst [vmem:[%s233 + $0x120] sm:$0xff] %v2021
        %2150 = vst [vmem:[%s233 + $0x128] sm:$0xff] %v2022
        %2151 = vst [vmem:[%s233 + $0x130] sm:$0xf] %v2023
        %2152 = vst [vmem:[%s233 + $0x134] sm:$0xff] %v2024
        %2153 = vst [vmem:[%s233 + $0x13c] sm:$0xff] %v2025
        %2154 = vst [vmem:[%s233 + $0x144] sm:$0xff] %v2026
        %2155 = vst [vmem:[%s233 + $0x14c] sm:$0xf] %v2027
        %2156 = vst [vmem:[%s233 + $0x150] sm:$0xff] %v2028
        %2157 = vst [vmem:[%s233 + $0x158] sm:$0xff] %v2029
        %2158 = vst [vmem:[%s233 + $0x160] sm:$0xff] %v2030
        %2159 = vst [vmem:[%s233 + $0x168] sm:$0xf] %v2031
        %2160 = vst [vmem:[%s233 + $0x16c] sm:$0xff] %v2032
        %2161 = vst [vmem:[%s233 + $0x174] sm:$0xff] %v2033
        %2162 = vst [vmem:[%s233 + $0x17c] sm:$0xff] %v2034
        %2163 = vst [vmem:[%s233 + $0x184] sm:$0xf] %v2035
        %2164 = vst [vmem:[%s233 + $0x188] sm:$0xff] %v2036
        %2165 = vst [vmem:[%s233 + $0x190] sm:$0xff] %v2037
        %2166 = vst [vmem:[%s233 + $0x198] sm:$0xff] %v2038
        %2167 = vst [vmem:[%s233 + $0x1a0] sm:$0xf] %v2039
        %2168 = vst [vmem:[%s233 + $0x1a4] sm:$0xff] %v2040
        %2169 = vst [vmem:[%s233 + $0x1ac] sm:$0xff] %v2041
        %2170 = vst [vmem:[%s233 + $0x1b4] sm:$0xff] %v2042
        %2171 = vst [vmem:[%s233 + $0x1bc] sm:$0xf] %v2043
        %s2172 = sand.u32 %s138, 1
        %s2173 = scalar_lea.sflag [#allocation4], %s2172
        %s2174 = sand.u32 %s138, 1
        %s2175 = smul.addr %s2174, 448
        %s2176 = scalar_lea.vmem [#allocation5], %s2175
        // Predicated region
        $region45: #{tpu_custom_call.1} parent=39 // pred_check
          %p2177 = pneg %p148
        $region46: #{tpu_custom_call.1} parent=39 // pred_check_branch
          %2179 = sbr.rel (%p2177) target = $region48
        $region47: #{tpu_custom_call.1} parent=39 // pred_region
          %s2180 = smul.u32 16, %s20
          %s2182 = ssub.s32 7168, 7168
          %2183 = vsyncadd %s2173, %s2182
          %s2184 = smul.addr %s2180, 7
          %s2185 = smul.addr %s2184, 64
          %s2186 = scalar_lea.hbm %s5, %s2185
          %s2187 = sshll.u32 %s2176, 4
          %s2188 = int_to_ptr.vmem [resolvable:$true] %s2187
          %2193 = dma.vmem_to_hbm [thread:$0]  %s2188, 7168, %s2186, %s2173, 448, 448, 28
        $region48: #{tpu_custom_call.1} parent=39 // pred_fallthru
          _
      $region40: #{tpu_custom_call.1} parent=5 // pred_fallthru
        _
      %p2194 = scmp.le.s32.totalorder 2, %s15
      // Predicated region
      $region49: #{tpu_custom_call.1} parent=5 // pred_check
        %p2195 = pneg %p2194
      $region50: #{tpu_custom_call.1} parent=5 // pred_check_branch
        %2197 = sbr.rel (%p2195) target = $region52
      $region51: #{tpu_custom_call.1} parent=5 // pred_region
        %s2198 = ssub.s32 %s15, 2
        // Predicated region
        $region53: #{tpu_custom_call.1} parent=51 // pred_check
          %p2199 = pneg %p154
        $region54: #{tpu_custom_call.1} parent=51 // pred_check_branch
          %2201 = sbr.rel (%p2199) target = $region56
        $region55: #{tpu_custom_call.1} parent=51 // pred_region
          %s2202 = sand.u32 %s139, 1
          %s2203 = scalar_lea.sflag [#allocation4], %s2202
          %s2204 = sand.u32 %s139, 1
          %s2205 = smul.addr %s2204, 448
          %s2206 = scalar_lea.vmem [#allocation5], %s2205
          %2207 = dma.done %s2203, 7168
        $region56: #{tpu_custom_call.1} parent=51 // pred_fallthru
          _
      $region52: #{tpu_custom_call.1} parent=5 // pred_fallthru
        _
    $region6: #{tpu_custom_call.1} parent=1 // loop_footer
      %s19 = sadd.s32 1, %s15
    $region7: #{tpu_custom_call.1} parent=1 // loop_footer_branch
      %14 = sbr.rel target = $region3
    $region8: #{tpu_custom_call.1} parent=1 // loop_exit
      _
    %2208 = vsyncpa [#allocation3], 1
    %s2209 = scalar_lea.sflag [#allocation3], 1
    %2210 = vsyncpa %s2209, 1
    %2211 = vsyncpa [#allocation4], 1
    %s2212 = scalar_lea.sflag [#allocation4], 1
    %2213 = vsyncpa %s2212, 1

</llo_original>
